<compile_context>
chip_gen: v5e
topology: v5e:2x2
jax: 0.10.0
libtpu: 0.0.40
codegen_flags: <defaults>
</compile_context>

<pallas_src>
import functools

import jax
import jax.numpy as jnp
from jax.experimental import pallas as pl
from jax.experimental.pallas import tpu as pltpu


def _cdiv(a, b):
    return -(-a // b)


def _round_up(a, m):
    return _cdiv(a, m) * m


def _vq_kernel(x_ref, ed_ref, e2h_ref, eq_hi_ref, eq_lo_ref,
               quant_ref, idx_ref, count_ref, sqerr_ref,
               *, R, n_valid, matmul_dtype):
    tm = x_ref.shape[0]                 # packed rows per tile (8-multiple)
    RK = ed_ref.shape[1]                # R * num_embeddings
    K = RK // R

    x = x_ref[...]                      # (tm, R*D), native dtype, lane-dense load

    # Argmin-equivalent half distance: 0.5*||e||^2 - x.e  (per-pixel ||x||^2 dropped).
    # Block-diagonal codebook gives all R packed pixels their (tm, K) column group.
    cross = jnp.dot(x.astype(matmul_dtype), ed_ref[...],
                    preferred_element_type=jnp.float32)       # (tm, R*K) on the MXU
    half = e2h_ref[...] - cross                                # (tm, R*K)

    lane4 = jax.lax.broadcasted_iota(jnp.int32, (tm, RK), 1)
    col_r = jax.lax.broadcasted_iota(jnp.int32, (tm, R), 1)
    target = jnp.full((tm, RK), -1, jnp.int32)                 # -1 never matches a lane
    idx_cols = jnp.zeros((tm, R), jnp.int32)

    if n_valid is not None:
        rows = (pl.program_id(0) * tm
                + jax.lax.broadcasted_iota(jnp.int32, (tm, 1), 0))

    for j in range(R):                                         # R <= 8, static unroll
        d_j = half[:, j * K:(j + 1) * K]                       # (tm, K) lane-tile slice
        dmin = jnp.min(d_j, axis=1, keepdims=True)
        lane = jax.lax.broadcasted_iota(jnp.int32, (tm, K), 1)
        # first-occurrence argmin (matches torch.argmin tie-break)
        idx_j = jnp.min(jnp.where(d_j <= dmin, lane, K), axis=1, keepdims=True)
        idx_cols = jnp.where(col_r == j, idx_j, idx_cols)
        glob_j = idx_j + j * K
        if n_valid is not None:
            # fold the padded-pixel mask into the one-hot construction
            glob_j = jnp.where(rows * R + j < n_valid, glob_j, -1)
        in_grp = (lane4 >= j * K) & (lane4 < (j + 1) * K)
        target = jnp.where(in_grp, glob_j, target)

    enc = (lane4 == target).astype(jnp.float32)                # grouped one-hot (tm, R*K)

    # quantized = one-hot @ block-diagonal codebook, bf16 hi/lo split -> ~f32-exact rows.
    enc_b = enc.astype(jnp.bfloat16)
    quant = (jnp.dot(enc_b, eq_hi_ref[...], preferred_element_type=jnp.float32)
             + jnp.dot(enc_b, eq_lo_ref[...], preferred_element_type=jnp.float32))

    quant_ref[...] = quant.astype(quant_ref.dtype)             # lane-dense store (R*D lanes)
    idx_ref[...] = idx_cols                                    # tiny int32 index output

    # Per-tile statistics: true values masked into sublane 0 (wrapper just sums).
    counts = jnp.sum(enc, axis=0, keepdims=True)               # (1, R*K) per-code counts
    row8 = jax.lax.broadcasted_iota(jnp.int32, (8, RK), 0)
    count_ref[...] = jnp.where(row8 == 0, counts, 0.0)

    diff = quant - x.astype(jnp.float32)                       # padded pixels: 0 - 0
    sq = jnp.sum(diff * diff)
    r8 = jax.lax.broadcasted_iota(jnp.int32, (8, 128), 0)
    l8 = jax.lax.broadcasted_iota(jnp.int32, (8, 128), 1)
    sqerr_ref[...] = jnp.where((r8 == 0) & (l8 == 0), sq, 0.0)


def _derive_tiles(n_pix, K, D, R, block_pixels=None):
    """Pick tile size (pixels) and grid length; VMEM-capped, v7x-megacore friendly."""
    unit = 8 * R                                    # 8 sublanes of packed rows
    if block_pixels is None:
        # per-pixel live f32 bytes: x+quant (double-buffered) + dist/one-hot/index temps
        per_pixel_bytes = 4 * (4 * D + 5 * K)
        budget = 24 * 1024 * 1024                   # headroom vs v7x's 64 MiB physical VMEM
        target = (budget // per_pixel_bytes) // unit * unit
        target = max(unit, min(4096, target))
    else:
        target = max(unit, (block_pixels // unit) * unit)
    g = _cdiv(n_pix, target)
    if g == 1 and n_pix > unit:
        g = 2                                       # let v7x's 2nd TensorCore work
    if g > 1 and g % 2 == 1:
        g += 1                                      # balanced 2-TC sharding
    tile = _round_up(_cdiv(n_pix, g), unit)
    g = _cdiv(n_pix, tile)
    return tile, g


def vq_ema_forward(x_nchw, embedding_weight, commitment_cost, *,
                   block_pixels=None, matmul_dtype=jnp.bfloat16):
    """Forward pass of VectorQuantizerEMA (eval-mode semantics).

    Returns (loss, quantized_nchw, perplexity, encodings) like the PyTorch module.
    matmul_dtype controls the distance matmul only (bf16 default: MXU-native on all
    gens; argmin is tolerant to rare near-tie flips).  Quantized rows are produced
    via a bf16 hi/lo codebook split (near-exact f32 codebook rows).
    """
    B, C, H, W = x_nchw.shape
    K, D = embedding_weight.shape
    assert C == D, "input channels must equal embedding_dim"

    # Lane packing factor: R adjacent pixels share one (R*D)-lane row when possible.
    R = max(1, min(8, 128 // D)) if (D <= 128 and 128 % D == 0) else 1

    # NCHW -> NHWC -> (N, D): same permute the PyTorch module performs.
    # Input stays in its native dtype (cast happens in-kernel).
    x_nhwc = jnp.transpose(x_nchw, (0, 2, 3, 1))
    flat = x_nhwc.reshape(-1, D)
    N = flat.shape[0]

    tile_pix, g = _derive_tiles(N, K, D, R, block_pixels)
    n_pad = g * tile_pix
    flat_p = jnp.pad(flat, ((0, n_pad - N), (0, 0))) if n_pad != N else flat
    Mp, tm = n_pad // R, tile_pix // R
    x_packed = flat_p.reshape(Mp, R * D)             # free row-major reshape

    e = embedding_weight.astype(jnp.float32)
    e2h = 0.5 * jnp.sum(e * e, axis=1)[None, :]      # (1, K)
    e2h_t = jnp.tile(e2h, (1, R))                    # (1, R*K)

    # Block-diagonal codebooks (built once per call, VMEM-resident across the grid).
    ed = jnp.zeros((R * D, R * K), jnp.float32)      # distances:  x_packed @ ed
    eq = jnp.zeros((R * K, R * D), jnp.float32)      # quantize:   one-hot @ eq
    for j in range(R):
        ed = ed.at[j * D:(j + 1) * D, j * K:(j + 1) * K].set(e.T)
        eq = eq.at[j * K:(j + 1) * K, j * D:(j + 1) * D].set(e)
    eq_hi = eq.astype(jnp.bfloat16)
    eq_lo = (eq - eq_hi.astype(jnp.float32)).astype(jnp.bfloat16)
    ed_m = ed.astype(matmul_dtype)

    kernel = functools.partial(
        _vq_kernel, R=R,
        n_valid=(N if n_pad != N else None),
        matmul_dtype=matmul_dtype)

    quant_p, idx_p, count_p, sqerr_p = pl.pallas_call(
        kernel,
        grid=(g,),
        out_shape=(
            jax.ShapeDtypeStruct((Mp, R * D), jnp.float32),    # quantized (packed, lane-dense)
            jax.ShapeDtypeStruct((Mp, R), jnp.int32),          # argmin indices (packed)
            jax.ShapeDtypeStruct((g * 8, R * K), jnp.float32), # per-tile code counts
            jax.ShapeDtypeStruct((g * 8, 128), jnp.float32),   # per-tile squared-error sums
        ),
        in_specs=[
            pl.BlockSpec((tm, R * D), lambda i: (i, 0)),       # packed inputs
            pl.BlockSpec((R * D, R * K), lambda i: (0, 0)),    # block-diag codebook (dist)
            pl.BlockSpec((1, R * K), lambda i: (0, 0)),        # 0.5*||e||^2, tiled
            pl.BlockSpec((R * K, R * D), lambda i: (0, 0)),    # block-diag codebook hi
            pl.BlockSpec((R * K, R * D), lambda i: (0, 0)),    # block-diag codebook lo
        ],
        out_specs=(
            pl.BlockSpec((tm, R * D), lambda i: (i, 0)),
            pl.BlockSpec((tm, R), lambda i: (i, 0)),
            pl.BlockSpec((8, R * K), lambda i: (i, 0)),
            pl.BlockSpec((8, 128), lambda i: (i, 0)),
        ),
        compiler_params=pltpu.CompilerParams(
            dimension_semantics=("parallel",),                 # no cross-tile state
            vmem_limit_bytes=48 * 1024 * 1024,
        ),
    )(x_packed, ed_m, e2h_t, eq_hi, eq_lo)

    quant_flat = quant_p.reshape(n_pad, D)[:N]
    idx_flat = idx_p.reshape(-1)[:N]
    # Rebuild the one-hot the module returns (only materialized here, not in the kernel).
    encodings = jax.nn.one_hot(idx_flat, K, dtype=jnp.float32)

    # Scalar statistics from the tiny per-tile partials.
    counts = jnp.sum(count_p.reshape(-1, R, K), axis=(0, 1))   # (K,) exact counts
    avg_probs = counts / jnp.float32(N)
    perplexity = jnp.exp(-jnp.sum(avg_probs * jnp.log(avg_probs + 1e-10)))

    e_latent_loss = jnp.sum(sqerr_p) / jnp.float32(N * D)
    loss = jnp.float32(commitment_cost) * e_latent_loss

    # Straight-through estimator (same forward value, gradients flow to the inputs).
    flat32 = flat.astype(jnp.float32)
    quant_st = flat32 + jax.lax.stop_gradient(quant_flat - flat32)
    quantized_nchw = jnp.transpose(quant_st.reshape(B, H, W, D), (0, 3, 1, 2))
    return loss, quantized_nchw, perplexity, encodings


def _reference_forward(x_nchw, embedding_weight, commitment_cost):
    """Plain-JAX port of the PyTorch eval-mode forward (for validation)."""
    B, C, H, W = x_nchw.shape
    e = embedding_weight.astype(jnp.float32)
    x = jnp.transpose(x_nchw, (0, 2, 3, 1)).reshape(-1, C).astype(jnp.float32)
    d = (jnp.sum(x ** 2, axis=1, keepdims=True)
         + jnp.sum(e ** 2, axis=1)[None, :]
         - 2.0 * jnp.dot(x, e.T, precision=jax.lax.Precision.HIGHEST))
    idx = jnp.argmin(d, axis=1)
    enc = jax.nn.one_hot(idx, e.shape[0], dtype=jnp.float32)
    quant = e[idx]
    loss = commitment_cost * jnp.mean((quant - x) ** 2)
    avg_probs = jnp.mean(enc, axis=0)
    perplexity = jnp.exp(-jnp.sum(avg_probs * jnp.log(avg_probs + 1e-10)))
    quant_nchw = jnp.transpose(quant.reshape(B, H, W, C), (0, 3, 1, 2))
    return loss, quant_nchw, perplexity, enc


if __name__ == "__main__":
    num_embeddings = 128
    embedding_dim = 32
    commitment_cost = 0.25
    # decay / epsilon belong to the training-mode EMA state update (see TODO above)

    key = jax.random.PRNGKey(0)
    k_emb, k_x, k_x2 = jax.random.split(key, 3)

    # nn.Embedding(...).weight.data.normal_()
    embedding_weight = jax.random.normal(
        k_emb, (num_embeddings, embedding_dim), dtype=jnp.float32)

    # NCHW input, channels == embedding_dim: N = 2*16*16 = 512 pixels, R = 4
    # -> lane-dense packed path with a 2-step "parallel" grid.
    x = jax.random.normal(k_x, (2, embedding_dim, 16, 16), dtype=jnp.float32)
    loss, quantized, perplexity, encodings = vq_ema_forward(
        x, embedding_weight, commitment_cost)
    jax.block_until_ready((loss, quantized, perplexity, encodings))

    assert quantized.shape == x.shape
    assert encodings.shape == (2 * 16 * 16, num_embeddings)

    rl, rq, rp, renc = _reference_forward(x, embedding_weight, commitment_cost)
    idx_k = jnp.argmax(encodings, axis=1)
    idx_r = jnp.argmax(renc, axis=1)
    agree = float(jnp.mean((idx_k == idx_r).astype(jnp.float32)))
    assert agree > 0.99, f"codebook assignment agreement too low: {agree}"
    assert abs(float(loss) - float(rl)) / max(abs(float(rl)), 1e-6) < 1e-2
    assert abs(float(perplexity) - float(rp)) / float(rp) < 2e-2

    # Ragged N (= 25) exercises zero-pad + in-kernel pixel masking.
    x_odd = jax.random.normal(k_x2, (1, embedding_dim, 5, 5), dtype=jnp.float32)
    l2, q2, p2, e2o = vq_ema_forward(x_odd, embedding_weight, commitment_cost)
    jax.block_until_ready((l2, q2, p2, e2o))
    assert q2.shape == x_odd.shape
    assert e2o.shape == (25, num_embeddings)
    rl2, _, rp2, _ = _reference_forward(x_odd, embedding_weight, commitment_cost)
    assert abs(float(l2) - float(rl2)) / max(abs(float(rl2)), 1e-6) < 1e-2
    assert abs(float(p2) - float(rp2)) / float(rp2) < 2e-2

    print("KERNEL_OK")
</pallas_src>

<mosaic_0001>
module attributes {stable_mosaic.version = 11 : i64} {
  func.func @_vq_kernel(%arg0: i32, %arg1: memref<64x128xf32, #tpu.memory_space<vmem>>, %arg2: memref<128x512xbf16, #tpu.memory_space<vmem>>, %arg3: memref<1x512xf32, #tpu.memory_space<vmem>>, %arg4: memref<512x128xbf16, #tpu.memory_space<vmem>>, %arg5: memref<512x128xbf16, #tpu.memory_space<vmem>>, %arg6: memref<64x128xf32, #tpu.memory_space<vmem>>, %arg7: memref<64x4xi32, #tpu.memory_space<vmem>>, %arg8: memref<8x512xf32, #tpu.memory_space<vmem>>, %arg9: memref<8x128xf32, #tpu.memory_space<vmem>>) attributes {dimension_semantics = [#tpu.dimension_semantics<parallel>], iteration_bounds = array<i64: 2>, scalar_prefetch = 0 : i64, scratch_operands = 0 : i64, tpu.core_type = #tpu.core_type<tc>, window_params = [{transform_indices = @transform_0, window_bounds = array<i64: 64, 128>}, {pipeline_mode = #tpu.pipeline_mode<synchronous>, transform_indices = @transform_1, window_bounds = array<i64: 128, 512>}, {pipeline_mode = #tpu.pipeline_mode<synchronous>, transform_indices = @transform_2, window_bounds = array<i64: 1, 512>}, {pipeline_mode = #tpu.pipeline_mode<synchronous>, transform_indices = @transform_3, window_bounds = array<i64: 512, 128>}, {pipeline_mode = #tpu.pipeline_mode<synchronous>, transform_indices = @transform_4, window_bounds = array<i64: 512, 128>}, {transform_indices = @transform_5, window_bounds = array<i64: 64, 128>}, {transform_indices = @transform_6, window_bounds = array<i64: 64, 4>}, {transform_indices = @transform_7, window_bounds = array<i64: 8, 512>}, {transform_indices = @transform_8, window_bounds = array<i64: 8, 128>}]} {
    %c0 = arith.constant 0 : index
    %c0_0 = arith.constant 0 : index
    %0 = vector.load %arg1[%c0, %c0_0] : memref<64x128xf32, #tpu.memory_space<vmem>>, vector<64x128xf32>
    %1 = arith.truncf %0 : vector<64x128xf32> to vector<64x128xbf16>
    %c0_1 = arith.constant 0 : index
    %c0_2 = arith.constant 0 : index
    %2 = vector.load %arg2[%c0_1, %c0_2] : memref<128x512xbf16, #tpu.memory_space<vmem>>, vector<128x512xbf16>
    %cst = arith.constant dense<0.000000e+00> : vector<64x512xf32>
    %3 = tpu.matmul %1, %2, %cst {dimension_numbers = #tpu.dot_dimension_numbers<[1], [0], [0], [1], [0, 0, 1, 1], [], []>} : vector<64x128xbf16>, vector<128x512xbf16>, vector<64x512xf32> -> vector<64x512xf32>
    %c0_3 = arith.constant 0 : index
    %c0_4 = arith.constant 0 : index
    %4 = vector.load %arg3[%c0_3, %c0_4] : memref<1x512xf32, #tpu.memory_space<vmem>>, vector<1x512xf32>
    %5 = vector.broadcast %4 : vector<1x512xf32> to vector<64x512xf32>
    %6 = arith.subf %5, %3 : vector<64x512xf32>
    %7 = tpu.iota {dimensions = array<i32: 1>} : vector<64x512xi32>
    %8 = tpu.iota {dimensions = array<i32: 1>} : vector<64x4xi32>
    %c-1_i32 = arith.constant -1 : i32
    %9 = vector.broadcast %c-1_i32 : i32 to vector<64x512xi32>
    %c0_i32 = arith.constant 0 : i32
    %10 = vector.broadcast %c0_i32 : i32 to vector<64x4xi32>
    %11 = vector.extract_strided_slice %6 {offsets = [0, 0], sizes = [64, 128], strides = [1, 1]} : vector<64x512xf32> to vector<64x128xf32>
    %cst_5 = arith.constant dense<0x7F800000> : vector<64xf32>
    %12 = vector.multi_reduction <minimumf>, %11, %cst_5 [1] : vector<64x128xf32> to vector<64xf32>
    %13 = vector.shape_cast %12 : vector<64xf32> to vector<64x1xf32>
    %14 = tpu.iota {dimensions = array<i32: 1>} : vector<64x128xi32>
    %15 = vector.broadcast %13 : vector<64x1xf32> to vector<64x128xf32>
    %16 = arith.cmpf ole, %11, %15 : vector<64x128xf32>
    %c128_i32 = arith.constant 128 : i32
    %17 = vector.broadcast %c128_i32 : i32 to vector<64x128xi32>
    %18 = arith.select %16, %14, %17 : vector<64x128xi1>, vector<64x128xi32>
    %cst_6 = arith.constant dense<2147483647> : vector<64xi32>
    %19 = vector.multi_reduction <minsi>, %18, %cst_6 [1] : vector<64x128xi32> to vector<64xi32>
    %20 = vector.shape_cast %19 : vector<64xi32> to vector<64x1xi32>
    %c0_i32_7 = arith.constant 0 : i32
    %21 = vector.broadcast %c0_i32_7 : i32 to vector<64x4xi32>
    %22 = arith.cmpi eq, %8, %21 : vector<64x4xi32>
    %23 = vector.shape_cast %20 : vector<64x1xi32> to vector<64x1xi32>
    %24 = vector.broadcast %23 : vector<64x1xi32> to vector<64x4xi32>
    %25 = arith.select %22, %24, %10 : vector<64x4xi1>, vector<64x4xi32>
    %c0_i32_8 = arith.constant 0 : i32
    %26 = vector.broadcast %c0_i32_8 : i32 to vector<64x1xi32>
    %27 = arith.addi %20, %26 : vector<64x1xi32>
    %c0_i32_9 = arith.constant 0 : i32
    %28 = vector.broadcast %c0_i32_9 : i32 to vector<64x512xi32>
    %29 = arith.cmpi sge, %7, %28 : vector<64x512xi32>
    %c128_i32_10 = arith.constant 128 : i32
    %30 = vector.broadcast %c128_i32_10 : i32 to vector<64x512xi32>
    %31 = arith.cmpi slt, %7, %30 : vector<64x512xi32>
    %32 = arith.andi %29, %31 : vector<64x512xi1>
    %33 = vector.shape_cast %27 : vector<64x1xi32> to vector<64x1xi32>
    %34 = vector.broadcast %33 : vector<64x1xi32> to vector<64x512xi32>
    %35 = arith.select %32, %34, %9 : vector<64x512xi1>, vector<64x512xi32>
    %36 = vector.extract_strided_slice %6 {offsets = [0, 128], sizes = [64, 128], strides = [1, 1]} : vector<64x512xf32> to vector<64x128xf32>
    %cst_11 = arith.constant dense<0x7F800000> : vector<64xf32>
    %37 = vector.multi_reduction <minimumf>, %36, %cst_11 [1] : vector<64x128xf32> to vector<64xf32>
    %38 = vector.shape_cast %37 : vector<64xf32> to vector<64x1xf32>
    %39 = tpu.iota {dimensions = array<i32: 1>} : vector<64x128xi32>
    %40 = vector.broadcast %38 : vector<64x1xf32> to vector<64x128xf32>
    %41 = arith.cmpf ole, %36, %40 : vector<64x128xf32>
    %c128_i32_12 = arith.constant 128 : i32
    %42 = vector.broadcast %c128_i32_12 : i32 to vector<64x128xi32>
    %43 = arith.select %41, %39, %42 : vector<64x128xi1>, vector<64x128xi32>
    %cst_13 = arith.constant dense<2147483647> : vector<64xi32>
    %44 = vector.multi_reduction <minsi>, %43, %cst_13 [1] : vector<64x128xi32> to vector<64xi32>
    %45 = vector.shape_cast %44 : vector<64xi32> to vector<64x1xi32>
    %c1_i32 = arith.constant 1 : i32
    %46 = vector.broadcast %c1_i32 : i32 to vector<64x4xi32>
    %47 = arith.cmpi eq, %8, %46 : vector<64x4xi32>
    %48 = vector.shape_cast %45 : vector<64x1xi32> to vector<64x1xi32>
    %49 = vector.broadcast %48 : vector<64x1xi32> to vector<64x4xi32>
    %50 = arith.select %47, %49, %25 : vector<64x4xi1>, vector<64x4xi32>
    %c128_i32_14 = arith.constant 128 : i32
    %51 = vector.broadcast %c128_i32_14 : i32 to vector<64x1xi32>
    %52 = arith.addi %45, %51 : vector<64x1xi32>
    %c128_i32_15 = arith.constant 128 : i32
    %53 = vector.broadcast %c128_i32_15 : i32 to vector<64x512xi32>
    %54 = arith.cmpi sge, %7, %53 : vector<64x512xi32>
    %c256_i32 = arith.constant 256 : i32
    %55 = vector.broadcast %c256_i32 : i32 to vector<64x512xi32>
    %56 = arith.cmpi slt, %7, %55 : vector<64x512xi32>
    %57 = arith.andi %54, %56 : vector<64x512xi1>
    %58 = vector.shape_cast %52 : vector<64x1xi32> to vector<64x1xi32>
    %59 = vector.broadcast %58 : vector<64x1xi32> to vector<64x512xi32>
    %60 = arith.select %57, %59, %35 : vector<64x512xi1>, vector<64x512xi32>
    %61 = vector.extract_strided_slice %6 {offsets = [0, 256], sizes = [64, 128], strides = [1, 1]} : vector<64x512xf32> to vector<64x128xf32>
    %cst_16 = arith.constant dense<0x7F800000> : vector<64xf32>
    %62 = vector.multi_reduction <minimumf>, %61, %cst_16 [1] : vector<64x128xf32> to vector<64xf32>
    %63 = vector.shape_cast %62 : vector<64xf32> to vector<64x1xf32>
    %64 = tpu.iota {dimensions = array<i32: 1>} : vector<64x128xi32>
    %65 = vector.broadcast %63 : vector<64x1xf32> to vector<64x128xf32>
    %66 = arith.cmpf ole, %61, %65 : vector<64x128xf32>
    %c128_i32_17 = arith.constant 128 : i32
    %67 = vector.broadcast %c128_i32_17 : i32 to vector<64x128xi32>
    %68 = arith.select %66, %64, %67 : vector<64x128xi1>, vector<64x128xi32>
    %cst_18 = arith.constant dense<2147483647> : vector<64xi32>
    %69 = vector.multi_reduction <minsi>, %68, %cst_18 [1] : vector<64x128xi32> to vector<64xi32>
    %70 = vector.shape_cast %69 : vector<64xi32> to vector<64x1xi32>
    %c2_i32 = arith.constant 2 : i32
    %71 = vector.broadcast %c2_i32 : i32 to vector<64x4xi32>
    %72 = arith.cmpi eq, %8, %71 : vector<64x4xi32>
    %73 = vector.shape_cast %70 : vector<64x1xi32> to vector<64x1xi32>
    %74 = vector.broadcast %73 : vector<64x1xi32> to vector<64x4xi32>
    %75 = arith.select %72, %74, %50 : vector<64x4xi1>, vector<64x4xi32>
    %c256_i32_19 = arith.constant 256 : i32
    %76 = vector.broadcast %c256_i32_19 : i32 to vector<64x1xi32>
    %77 = arith.addi %70, %76 : vector<64x1xi32>
    %c256_i32_20 = arith.constant 256 : i32
    %78 = vector.broadcast %c256_i32_20 : i32 to vector<64x512xi32>
    %79 = arith.cmpi sge, %7, %78 : vector<64x512xi32>
    %c384_i32 = arith.constant 384 : i32
    %80 = vector.broadcast %c384_i32 : i32 to vector<64x512xi32>
    %81 = arith.cmpi slt, %7, %80 : vector<64x512xi32>
    %82 = arith.andi %79, %81 : vector<64x512xi1>
    %83 = vector.shape_cast %77 : vector<64x1xi32> to vector<64x1xi32>
    %84 = vector.broadcast %83 : vector<64x1xi32> to vector<64x512xi32>
    %85 = arith.select %82, %84, %60 : vector<64x512xi1>, vector<64x512xi32>
    %86 = vector.extract_strided_slice %6 {offsets = [0, 384], sizes = [64, 128], strides = [1, 1]} : vector<64x512xf32> to vector<64x128xf32>
    %cst_21 = arith.constant dense<0x7F800000> : vector<64xf32>
    %87 = vector.multi_reduction <minimumf>, %86, %cst_21 [1] : vector<64x128xf32> to vector<64xf32>
    %88 = vector.shape_cast %87 : vector<64xf32> to vector<64x1xf32>
    %89 = tpu.iota {dimensions = array<i32: 1>} : vector<64x128xi32>
    %90 = vector.broadcast %88 : vector<64x1xf32> to vector<64x128xf32>
    %91 = arith.cmpf ole, %86, %90 : vector<64x128xf32>
    %c128_i32_22 = arith.constant 128 : i32
    %92 = vector.broadcast %c128_i32_22 : i32 to vector<64x128xi32>
    %93 = arith.select %91, %89, %92 : vector<64x128xi1>, vector<64x128xi32>
    %cst_23 = arith.constant dense<2147483647> : vector<64xi32>
    %94 = vector.multi_reduction <minsi>, %93, %cst_23 [1] : vector<64x128xi32> to vector<64xi32>
    %95 = vector.shape_cast %94 : vector<64xi32> to vector<64x1xi32>
    %c3_i32 = arith.constant 3 : i32
    %96 = vector.broadcast %c3_i32 : i32 to vector<64x4xi32>
    %97 = arith.cmpi eq, %8, %96 : vector<64x4xi32>
    %98 = vector.shape_cast %95 : vector<64x1xi32> to vector<64x1xi32>
    %99 = vector.broadcast %98 : vector<64x1xi32> to vector<64x4xi32>
    %100 = arith.select %97, %99, %75 : vector<64x4xi1>, vector<64x4xi32>
    %c384_i32_24 = arith.constant 384 : i32
    %101 = vector.broadcast %c384_i32_24 : i32 to vector<64x1xi32>
    %102 = arith.addi %95, %101 : vector<64x1xi32>
    %c384_i32_25 = arith.constant 384 : i32
    %103 = vector.broadcast %c384_i32_25 : i32 to vector<64x512xi32>
    %104 = arith.cmpi sge, %7, %103 : vector<64x512xi32>
    %c512_i32 = arith.constant 512 : i32
    %105 = vector.broadcast %c512_i32 : i32 to vector<64x512xi32>
    %106 = arith.cmpi slt, %7, %105 : vector<64x512xi32>
    %107 = arith.andi %104, %106 : vector<64x512xi1>
    %108 = vector.shape_cast %102 : vector<64x1xi32> to vector<64x1xi32>
    %109 = vector.broadcast %108 : vector<64x1xi32> to vector<64x512xi32>
    %110 = arith.select %107, %109, %85 : vector<64x512xi1>, vector<64x512xi32>
    %111 = arith.cmpi eq, %7, %110 : vector<64x512xi32>
    %112 = arith.extui %111 : vector<64x512xi1> to vector<64x512xi32>
    %113 = arith.sitofp %112 : vector<64x512xi32> to vector<64x512xf32>
    %114 = arith.truncf %113 : vector<64x512xf32> to vector<64x512xbf16>
    %c0_26 = arith.constant 0 : index
    %c0_27 = arith.constant 0 : index
    %115 = vector.load %arg4[%c0_26, %c0_27] : memref<512x128xbf16, #tpu.memory_space<vmem>>, vector<512x128xbf16>
    %cst_28 = arith.constant dense<0.000000e+00> : vector<64x128xf32>
    %116 = tpu.matmul %114, %115, %cst_28 {dimension_numbers = #tpu.dot_dimension_numbers<[1], [0], [0], [1], [0, 0, 1, 1], [], []>} : vector<64x512xbf16>, vector<512x128xbf16>, vector<64x128xf32> -> vector<64x128xf32>
    %c0_29 = arith.constant 0 : index
    %c0_30 = arith.constant 0 : index
    %117 = vector.load %arg5[%c0_29, %c0_30] : memref<512x128xbf16, #tpu.memory_space<vmem>>, vector<512x128xbf16>
    %cst_31 = arith.constant dense<0.000000e+00> : vector<64x128xf32>
    %118 = tpu.matmul %114, %117, %cst_31 {dimension_numbers = #tpu.dot_dimension_numbers<[1], [0], [0], [1], [0, 0, 1, 1], [], []>} : vector<64x512xbf16>, vector<512x128xbf16>, vector<64x128xf32> -> vector<64x128xf32>
    %119 = arith.addf %116, %118 : vector<64x128xf32>
    %c0_32 = arith.constant 0 : index
    %c0_33 = arith.constant 0 : index
    %120 = vector.load %arg6[%c0_32, %c0_33] : memref<64x128xf32, #tpu.memory_space<vmem>>, vector<64x128xf32>
    tpu.vector_store %arg6[%c0_32, %c0_33], %119 {strides = array<i32>} : memref<64x128xf32, #tpu.memory_space<vmem>>, vector<64x128xf32>,
    %c0_34 = arith.constant 0 : index
    %c0_35 = arith.constant 0 : index
    %121 = vector.load %arg7[%c0_34, %c0_35] : memref<64x4xi32, #tpu.memory_space<vmem>>, vector<64x4xi32>
    tpu.vector_store %arg7[%c0_34, %c0_35], %100 {strides = array<i32>} : memref<64x4xi32, #tpu.memory_space<vmem>>, vector<64x4xi32>,
    %cst_36 = arith.constant dense<0.000000e+00> : vector<512xf32>
    %122 = vector.multi_reduction <add>, %113, %cst_36 [0] : vector<64x512xf32> to vector<512xf32>
    %123 = vector.shape_cast %122 : vector<512xf32> to vector<1x512xf32>
    %124 = tpu.iota {dimensions = array<i32: 0>} : vector<8x512xi32>
    %c0_i32_37 = arith.constant 0 : i32
    %125 = vector.broadcast %c0_i32_37 : i32 to vector<8x512xi32>
    %126 = arith.cmpi eq, %124, %125 : vector<8x512xi32>
    %cst_38 = arith.constant 0.000000e+00 : f32
    %127 = vector.shape_cast %123 : vector<1x512xf32> to vector<1x512xf32>
    %128 = vector.broadcast %127 : vector<1x512xf32> to vector<8x512xf32>
    %129 = vector.broadcast %cst_38 : f32 to vector<8x512xf32>
    %130 = arith.select %126, %128, %129 : vector<8x512xi1>, vector<8x512xf32>
    %c0_39 = arith.constant 0 : index
    %c0_40 = arith.constant 0 : index
    %131 = vector.load %arg8[%c0_39, %c0_40] : memref<8x512xf32, #tpu.memory_space<vmem>>, vector<8x512xf32>
    tpu.vector_store %arg8[%c0_39, %c0_40], %130 {strides = array<i32>} : memref<8x512xf32, #tpu.memory_space<vmem>>, vector<8x512xf32>,
    %132 = arith.subf %119, %0 : vector<64x128xf32>
    %133 = arith.mulf %132, %132 : vector<64x128xf32>
    %134 = vector.shape_cast %133 : vector<64x128xf32> to vector<1x64x128xf32>
    %cst_41 = arith.constant dense<0.000000e+00> : vector<1xf32>
    %135 = vector.multi_reduction <add>, %134, %cst_41 [1, 2] : vector<1x64x128xf32> to vector<1xf32>
    %136 = vector.shape_cast %135 : vector<1xf32> to vector<1x1x1xf32>
    %137 = vector.extract %136[0, 0, 0] : f32 from vector<1x1x1xf32>
    %138 = tpu.iota {dimensions = array<i32: 0>} : vector<8x128xi32>
    %139 = tpu.iota {dimensions = array<i32: 1>} : vector<8x128xi32>
    %c0_i32_42 = arith.constant 0 : i32
    %140 = vector.broadcast %c0_i32_42 : i32 to vector<8x128xi32>
    %141 = arith.cmpi eq, %138, %140 : vector<8x128xi32>
    %c0_i32_43 = arith.constant 0 : i32
    %142 = vector.broadcast %c0_i32_43 : i32 to vector<8x128xi32>
    %143 = arith.cmpi eq, %139, %142 : vector<8x128xi32>
    %144 = arith.andi %141, %143 : vector<8x128xi1>
    %cst_44 = arith.constant 0.000000e+00 : f32
    %145 = vector.broadcast %137 : f32 to vector<8x128xf32>
    %146 = vector.broadcast %cst_44 : f32 to vector<8x128xf32>
    %147 = arith.select %144, %145, %146 : vector<8x128xi1>, vector<8x128xf32>
    %c0_45 = arith.constant 0 : index
    %c0_46 = arith.constant 0 : index
    %148 = vector.load %arg9[%c0_45, %c0_46] : memref<8x128xf32, #tpu.memory_space<vmem>>, vector<8x128xf32>
    tpu.vector_store %arg9[%c0_45, %c0_46], %147 {strides = array<i32>} : memref<8x128xf32, #tpu.memory_space<vmem>>, vector<8x128xf32>,
    return
  }
  func.func @transform_0(%arg0: i32) -> (i32, i32) {
    %c0_i32 = arith.constant 0 : i32
    %c0_i32_0 = arith.constant 0 : i32
    return %arg0, %c0_i32 : i32, i32
  }
  func.func @transform_1(%arg0: i32) -> (i32, i32) {
    %c0_i32 = arith.constant 0 : i32
    %c0_i32_0 = arith.constant 0 : i32
    %c0_i32_1 = arith.constant 0 : i32
    return %c0_i32, %c0_i32_0 : i32, i32
  }
  func.func @transform_2(%arg0: i32) -> (i32, i32) {
    %c0_i32 = arith.constant 0 : i32
    %c0_i32_0 = arith.constant 0 : i32
    %c0_i32_1 = arith.constant 0 : i32
    return %c0_i32, %c0_i32_0 : i32, i32
  }
  func.func @transform_3(%arg0: i32) -> (i32, i32) {
    %c0_i32 = arith.constant 0 : i32
    %c0_i32_0 = arith.constant 0 : i32
    %c0_i32_1 = arith.constant 0 : i32
    return %c0_i32, %c0_i32_0 : i32, i32
  }
  func.func @transform_4(%arg0: i32) -> (i32, i32) {
    %c0_i32 = arith.constant 0 : i32
    %c0_i32_0 = arith.constant 0 : i32
    %c0_i32_1 = arith.constant 0 : i32
    return %c0_i32, %c0_i32_0 : i32, i32
  }
  func.func @transform_5(%arg0: i32) -> (i32, i32) {
    %c0_i32 = arith.constant 0 : i32
    %c0_i32_0 = arith.constant 0 : i32
    return %arg0, %c0_i32 : i32, i32
  }
  func.func @transform_6(%arg0: i32) -> (i32, i32) {
    %c0_i32 = arith.constant 0 : i32
    %c0_i32_0 = arith.constant 0 : i32
    return %arg0, %c0_i32 : i32, i32
  }
  func.func @transform_7(%arg0: i32) -> (i32, i32) {
    %c0_i32 = arith.constant 0 : i32
    %c0_i32_0 = arith.constant 0 : i32
    return %arg0, %c0_i32 : i32, i32
  }
  func.func @transform_8(%arg0: i32) -> (i32, i32) {
    %c0_i32 = arith.constant 0 : i32
    %c0_i32_0 = arith.constant 0 : i32
    return %arg0, %c0_i32 : i32, i32
  }
}

</mosaic_0001>

<llo_original>
// kernel: tpu_custom_call.1
$region0: #{tpu_custom_call.1}
  #allocation0 [shape = 'u32[]', space=smem, size = 0x4, offset = 0x4, fixed_abs, tag = 'smem constant byte address 0x4 - core index']
  #allocation1 [shape = 'u32[72,128]{1,0:T(1,128)}', space=vmem, size = 0x9000, scoped, tag = 'internal scratch']
  %s0 = inlined_call_operand.hbm [shape: f32[128,128], index: 0, kind: input, shape index: {}]
  %s1 = inlined_call_operand.hbm [shape: bf16[128,512], index: 1, kind: input, shape index: {}]
  %s2 = inlined_call_operand.hbm [shape: f32[1,512], index: 2, kind: input, shape index: {}]
  %s3 = inlined_call_operand.hbm [shape: bf16[512,128], index: 3, kind: input, shape index: {}]
  %s4 = inlined_call_operand.hbm [shape: bf16[512,128], index: 4, kind: input, shape index: {}]
  %s5 = inlined_call_operand.hbm [shape: f32[128,128], index: 5, kind: output, shape index: {0}]
  %s6 = inlined_call_operand.vmem [shape: s32[128,4], index: 6, kind: output, shape index: {1}]
  %s7 = inlined_call_operand.hbm [shape: f32[16,512], index: 7, kind: output, shape index: {2}]
  %s8 = inlined_call_operand.hbm [shape: f32[16,128], index: 8, kind: output, shape index: {3}]
  %9 = xla_tuple %s5, %s6, %s7, %s8
  %s10 = sld [smem:[#allocation0]]
  $region97: #{tpu_custom_call.1} parent=0
    _
  %s12 = ssub.s32 1, %s10
  %s13 = scalar_select 0, %s12, %s10
  $region1: #{tpu_custom_call.1} parent=0
    #allocation2 [shape = 'u8[65536]{0}', space=vmem, size = 0x10000, scoped, tag = 'input window, operand 0']
    #allocation3 [shape = 's32[2]{0}', space=sflag, size = 0x8, scoped, tag = 'scoped memory for tpu_custom_call.1']
    #allocation4 [shape = 's32[2]{0}', space=sflag, size = 0x8, scoped, tag = 'scoped memory for tpu_custom_call.1']
    #allocation5 [shape = 'u8[131072]{0}', space=vmem, size = 0x20000, scoped, tag = 'input window, operand 1, single buffered']
    #allocation6 [shape = 's32[1]{0}', space=sflag, size = 0x4, scoped, tag = 'scoped memory for tpu_custom_call.1']
    #allocation7 [shape = 'u8[2048]{0}', space=vmem, size = 0x800, scoped, tag = 'input window, operand 2, single buffered']
    #allocation8 [shape = 'u8[131072]{0}', space=vmem, size = 0x20000, scoped, tag = 'input window, operand 3, single buffered']
    #allocation9 [shape = 's32[1]{0}', space=sflag, size = 0x4, scoped, tag = 'scoped memory for tpu_custom_call.1']
    #allocation10 [shape = 'u8[131072]{0}', space=vmem, size = 0x20000, scoped, tag = 'input window, operand 4, single buffered']
    #allocation11 [shape = 'u8[65536]{0}', space=vmem, size = 0x10000, scoped, tag = 'output window, operand 0']
    #allocation12 [shape = 'u8[32768]{0}', space=vmem, size = 0x8000, scoped, tag = 'output window, operand 2']
    #allocation13 [shape = 's32[2]{0}', space=sflag, size = 0x8, scoped, tag = 'scoped memory for tpu_custom_call.1']
    #allocation14 [shape = 'u8[8192]{0}', space=vmem, size = 0x2000, scoped, tag = 'output window, operand 3']
    %14 = vsyncpa [#allocation3], 0
    %s15 = scalar_lea.sflag [#allocation3], 1
    %16 = vsyncpa %s15, 0
    %17 = vsyncpa [#allocation6], 0
    %18 = vsyncpa [#allocation9], 0
    %19 = vsyncpa [#allocation4], 0
    %s20 = scalar_lea.sflag [#allocation4], 1
    %21 = vsyncpa %s20, 0
    %22 = vsyncpa [#allocation13], 0
    %s23 = scalar_lea.sflag [#allocation13], 1
    %24 = vsyncpa %s23, 0
    loop: start=0, step=1, limit=4
    $region2: #{tpu_custom_call.1} parent=1 // loop_pre_header
      _
    $region3: #{tpu_custom_call.1} parent=1 // loop_header
      %s26 = sphi 0, %s30
      %p27 = scmp.ge.s32.totalorder %s26, 4
      %s36 = sphi 0, %s38
      %s39 = sphi 0, %s36
      %s40 = sphi 0, %s39
      %s56 = sphi 0, %s40
      %s60 = sphi 0, %s60
      %s62 = sphi 0, %s60
      %s63 = sphi 0, %s62
      %s77 = sphi 0, %s63
      %s81 = sphi 0, %s81
      %s83 = sphi 0, %s81
      %s84 = sphi 0, %s83
      %s98 = sphi 0, %s84
      %s102 = sphi 0, %s102
      %s104 = sphi 0, %s102
      %s105 = sphi 0, %s104
      %s119 = sphi 0, %s105
      %s123 = sphi 0, %s123
      %s125 = sphi 0, %s123
      %s126 = sphi 0, %s125
      %s140 = sphi 0, %s126
      %s146 = sphi 0, %s148
      %s149 = sphi 0, %s146
      %s150 = sphi 0, %s149
      %s166 = sphi 0, %s150
      %s172 = sphi 0, %s174
      %s175 = sphi 0, %s172
      %s176 = sphi 0, %s175
      %s192 = sphi 0, %s176
      %s198 = sphi 0, %s200
      %s201 = sphi 0, %s198
      %s202 = sphi 0, %s201
      %s218 = sphi 0, %s202
      %s224 = sphi 0, %s226
      %s227 = sphi 0, %s224
      %s228 = sphi 0, %s227
      %s244 = sphi 0, %s228
    $region4: #{tpu_custom_call.1} parent=1 // loop_header_branch
      %29 = sbr.rel (%p27) target = $region8
    $region5: #{tpu_custom_call.1} parent=1 // loop_body
      %s31 = ssub.s32 %s26, 1
      %s32 = ssub.s32 %s26, 2
      %s33 = sadd.s32 %s26, 1
      %s34 = ssub.s32 %s26, %s33
      %p35 = scmp.eq.s32.totalorder %s34, 0
      %s37 = sadd.s32 %s36, 1
      %s38 = scalar_select %p35, %s36, %s37
      %p41 = pneg %p35
      %p42 = scmp.eq.s32.totalorder %s26, 1
      %p43 = por %p41, %p42
      %p44 = scmp.ne.s32.totalorder %s36, %s39
      %p45 = scmp.eq.s32.totalorder %s26, 0
      %p46 = por %p44, %p45
      %p47 = scmp.ne.s32.totalorder %s36, %s39
      %p48 = scmp.eq.s32.totalorder %s31, 1
      %p49 = por %p47, %p48
      %p50 = scmp.ne.s32.totalorder %s39, %s40
      %p51 = scmp.eq.s32.totalorder %s31, 0
      %p52 = por %p50, %p51
      %p53 = scmp.ne.s32.totalorder %s39, %s40
      %p54 = scmp.eq.s32.totalorder %s32, 1
      %p55 = por %p53, %p54
      %p57 = scmp.ne.s32.totalorder %s40, %s56
      %p58 = scmp.eq.s32.totalorder %s32, 0
      %p59 = por %p57, %p58
      %s61 = sadd.s32 %s60, 1
      %p64 = scmp.eq.s32.totalorder %s26, 1
      %p65 = scmp.ne.s32.totalorder %s60, %s62
      %p66 = scmp.eq.s32.totalorder %s26, 0
      %p67 = por %p65, %p66
      %p68 = scmp.ne.s32.totalorder %s60, %s62
      %p69 = scmp.eq.s32.totalorder %s31, 1
      %p70 = por %p68, %p69
      %p71 = scmp.ne.s32.totalorder %s62, %s63
      %p72 = scmp.eq.s32.totalorder %s31, 0
      %p73 = por %p71, %p72
      %p74 = scmp.ne.s32.totalorder %s62, %s63
      %p75 = scmp.eq.s32.totalorder %s32, 1
      %p76 = por %p74, %p75
      %p78 = scmp.ne.s32.totalorder %s63, %s77
      %p79 = scmp.eq.s32.totalorder %s32, 0
      %p80 = por %p78, %p79
      %s82 = sadd.s32 %s81, 1
      %p85 = scmp.eq.s32.totalorder %s26, 1
      %p86 = scmp.ne.s32.totalorder %s81, %s83
      %p87 = scmp.eq.s32.totalorder %s26, 0
      %p88 = por %p86, %p87
      %p89 = scmp.ne.s32.totalorder %s81, %s83
      %p90 = scmp.eq.s32.totalorder %s31, 1
      %p91 = por %p89, %p90
      %p92 = scmp.ne.s32.totalorder %s83, %s84
      %p93 = scmp.eq.s32.totalorder %s31, 0
      %p94 = por %p92, %p93
      %p95 = scmp.ne.s32.totalorder %s83, %s84
      %p96 = scmp.eq.s32.totalorder %s32, 1
      %p97 = por %p95, %p96
      %p99 = scmp.ne.s32.totalorder %s84, %s98
      %p100 = scmp.eq.s32.totalorder %s32, 0
      %p101 = por %p99, %p100
      %s103 = sadd.s32 %s102, 1
      %p106 = scmp.eq.s32.totalorder %s26, 1
      %p107 = scmp.ne.s32.totalorder %s102, %s104
      %p108 = scmp.eq.s32.totalorder %s26, 0
      %p109 = por %p107, %p108
      %p110 = scmp.ne.s32.totalorder %s102, %s104
      %p111 = scmp.eq.s32.totalorder %s31, 1
      %p112 = por %p110, %p111
      %p113 = scmp.ne.s32.totalorder %s104, %s105
      %p114 = scmp.eq.s32.totalorder %s31, 0
      %p115 = por %p113, %p114
      %p116 = scmp.ne.s32.totalorder %s104, %s105
      %p117 = scmp.eq.s32.totalorder %s32, 1
      %p118 = por %p116, %p117
      %p120 = scmp.ne.s32.totalorder %s105, %s119
      %p121 = scmp.eq.s32.totalorder %s32, 0
      %p122 = por %p120, %p121
      %s124 = sadd.s32 %s123, 1
      %p127 = scmp.eq.s32.totalorder %s26, 1
      %p128 = scmp.ne.s32.totalorder %s123, %s125
      %p129 = scmp.eq.s32.totalorder %s26, 0
      %p130 = por %p128, %p129
      %p131 = scmp.ne.s32.totalorder %s123, %s125
      %p132 = scmp.eq.s32.totalorder %s31, 1
      %p133 = por %p131, %p132
      %p134 = scmp.ne.s32.totalorder %s125, %s126
      %p135 = scmp.eq.s32.totalorder %s31, 0
      %p136 = por %p134, %p135
      %p137 = scmp.ne.s32.totalorder %s125, %s126
      %p138 = scmp.eq.s32.totalorder %s32, 1
      %p139 = por %p137, %p138
      %p141 = scmp.ne.s32.totalorder %s126, %s140
      %p142 = scmp.eq.s32.totalorder %s32, 0
      %p143 = por %p141, %p142
      %s144 = ssub.s32 %s26, %s33
      %p145 = scmp.eq.s32.totalorder %s144, 0
      %s147 = sadd.s32 %s146, 1
      %s148 = scalar_select %p145, %s146, %s147
      %p151 = pneg %p145
      %p152 = scmp.eq.s32.totalorder %s26, 1
      %p153 = por %p151, %p152
      %p154 = scmp.ne.s32.totalorder %s146, %s149
      %p155 = scmp.eq.s32.totalorder %s26, 0
      %p156 = por %p154, %p155
      %p157 = scmp.ne.s32.totalorder %s146, %s149
      %p158 = scmp.eq.s32.totalorder %s31, 1
      %p159 = por %p157, %p158
      %p160 = scmp.ne.s32.totalorder %s149, %s150
      %p161 = scmp.eq.s32.totalorder %s31, 0
      %p162 = por %p160, %p161
      %p163 = scmp.ne.s32.totalorder %s149, %s150
      %p164 = scmp.eq.s32.totalorder %s32, 1
      %p165 = por %p163, %p164
      %p167 = scmp.ne.s32.totalorder %s150, %s166
      %p168 = scmp.eq.s32.totalorder %s32, 0
      %p169 = por %p167, %p168
      %s170 = ssub.s32 %s26, %s33
      %p171 = scmp.eq.s32.totalorder %s170, 0
      %s173 = sadd.s32 %s172, 1
      %s174 = scalar_select %p171, %s172, %s173
      %p177 = pneg %p171
      %p178 = scmp.eq.s32.totalorder %s26, 1
      %p179 = por %p177, %p178
      %p180 = scmp.ne.s32.totalorder %s172, %s175
      %p181 = scmp.eq.s32.totalorder %s26, 0
      %p182 = por %p180, %p181
      %p183 = scmp.ne.s32.totalorder %s172, %s175
      %p184 = scmp.eq.s32.totalorder %s31, 1
      %p185 = por %p183, %p184
      %p186 = scmp.ne.s32.totalorder %s175, %s176
      %p187 = scmp.eq.s32.totalorder %s31, 0
      %p188 = por %p186, %p187
      %p189 = scmp.ne.s32.totalorder %s175, %s176
      %p190 = scmp.eq.s32.totalorder %s32, 1
      %p191 = por %p189, %p190
      %p193 = scmp.ne.s32.totalorder %s176, %s192
      %p194 = scmp.eq.s32.totalorder %s32, 0
      %p195 = por %p193, %p194
      %s196 = ssub.s32 %s26, %s33
      %p197 = scmp.eq.s32.totalorder %s196, 0
      %s199 = sadd.s32 %s198, 1
      %s200 = scalar_select %p197, %s198, %s199
      %p203 = pneg %p197
      %p204 = scmp.eq.s32.totalorder %s26, 1
      %p205 = por %p203, %p204
      %p206 = scmp.ne.s32.totalorder %s198, %s201
      %p207 = scmp.eq.s32.totalorder %s26, 0
      %p208 = por %p206, %p207
      %p209 = scmp.ne.s32.totalorder %s198, %s201
      %p210 = scmp.eq.s32.totalorder %s31, 1
      %p211 = por %p209, %p210
      %p212 = scmp.ne.s32.totalorder %s201, %s202
      %p213 = scmp.eq.s32.totalorder %s31, 0
      %p214 = por %p212, %p213
      %p215 = scmp.ne.s32.totalorder %s201, %s202
      %p216 = scmp.eq.s32.totalorder %s32, 1
      %p217 = por %p215, %p216
      %p219 = scmp.ne.s32.totalorder %s202, %s218
      %p220 = scmp.eq.s32.totalorder %s32, 0
      %p221 = por %p219, %p220
      %s222 = ssub.s32 %s26, %s33
      %p223 = scmp.eq.s32.totalorder %s222, 0
      %s225 = sadd.s32 %s224, 1
      %s226 = scalar_select %p223, %s224, %s225
      %p229 = pneg %p223
      %p230 = scmp.eq.s32.totalorder %s26, 1
      %p231 = por %p229, %p230
      %p232 = scmp.ne.s32.totalorder %s224, %s227
      %p233 = scmp.eq.s32.totalorder %s26, 0
      %p234 = por %p232, %p233
      %p235 = scmp.ne.s32.totalorder %s224, %s227
      %p236 = scmp.eq.s32.totalorder %s31, 1
      %p237 = por %p235, %p236
      %p238 = scmp.ne.s32.totalorder %s227, %s228
      %p239 = scmp.eq.s32.totalorder %s31, 0
      %p240 = por %p238, %p239
      %p241 = scmp.ne.s32.totalorder %s227, %s228
      %p242 = scmp.eq.s32.totalorder %s32, 1
      %p243 = por %p241, %p242
      %p245 = scmp.ne.s32.totalorder %s228, %s244
      %p246 = scmp.eq.s32.totalorder %s32, 0
      %p247 = por %p245, %p246
      %p248 = scmp.le.s32.totalorder 1, %s26
      %p249 = scmp.lt.s32.totalorder %s26, 3
      %p250 = pnand %p248, %p249
      %p251 = pneg %p250
      // Predicated region
      $region9: #{tpu_custom_call.1} parent=5 // pred_check
        _
      $region10: #{tpu_custom_call.1} parent=5 // pred_check_branch
        %253 = sbr.rel (%p250) target = $region12
      $region11: #{tpu_custom_call.1} parent=5 // pred_region
        %s254 = ssub.s32 %s26, 1
        // Predicated region
        $region13: #{tpu_custom_call.1} parent=11 // pred_check
          %p255 = pneg %p73
        $region14: #{tpu_custom_call.1} parent=11 // pred_check_branch
          %257 = sbr.rel (%p255) target = $region16
        $region15: #{tpu_custom_call.1} parent=11 // pred_region
          %259 = vsyncadd [#allocation6], 0
          %s260 = sshll.u32 %s1, 4
          %s261 = int_to_ptr.hbm [resolvable:$true] %s260
          %s262 = sshll.u32 [#allocation5], 4
          %s263 = int_to_ptr.vmem [resolvable:$true] %s262
          %268 = dma.hbm_to_vmem [thread:$0]  %s261, 4096, %s263, [#allocation6], 256, 256, 16
        $region16: #{tpu_custom_call.1} parent=11 // pred_fallthru
          _
        // Predicated region
        $region17: #{tpu_custom_call.1} parent=11 // pred_check
          %p269 = pneg %p94
        $region18: #{tpu_custom_call.1} parent=11 // pred_check_branch
          %271 = sbr.rel (%p269) target = $region20
        $region19: #{tpu_custom_call.1} parent=11 // pred_region
          %273 = vsyncadd [#allocation6], 0
          %s275 = sshll.u32 %s2, 4
          %s276 = int_to_ptr.hbm [resolvable:$true] %s275
          %s277 = sshll.u32 [#allocation7], 4
          %s278 = int_to_ptr.vmem [resolvable:$true] %s277
          %280 = dma.hbm_to_vmem [thread:$0]  %s276, 64, %s278, [#allocation6]
        $region20: #{tpu_custom_call.1} parent=11 // pred_fallthru
          _
        // Predicated region
        $region21: #{tpu_custom_call.1} parent=11 // pred_check
          %p281 = pneg %p115
        $region22: #{tpu_custom_call.1} parent=11 // pred_check_branch
          %283 = sbr.rel (%p281) target = $region24
        $region23: #{tpu_custom_call.1} parent=11 // pred_region
          %285 = vsyncadd [#allocation9], 0
          %s286 = sshll.u32 %s3, 4
          %s287 = int_to_ptr.hbm [resolvable:$true] %s286
          %s288 = sshll.u32 [#allocation8], 4
          %s289 = int_to_ptr.vmem [resolvable:$true] %s288
          %294 = dma.hbm_to_vmem [thread:$0]  %s287, 4096, %s289, [#allocation9], 64, 64, 4
        $region24: #{tpu_custom_call.1} parent=11 // pred_fallthru
          _
        // Predicated region
        $region25: #{tpu_custom_call.1} parent=11 // pred_check
          %p295 = pneg %p136
        $region26: #{tpu_custom_call.1} parent=11 // pred_check_branch
          %297 = sbr.rel (%p295) target = $region28
        $region27: #{tpu_custom_call.1} parent=11 // pred_region
          %299 = vsyncadd [#allocation9], 0
          %s300 = sshll.u32 %s4, 4
          %s301 = int_to_ptr.hbm [resolvable:$true] %s300
          %s302 = sshll.u32 [#allocation10], 4
          %s303 = int_to_ptr.vmem [resolvable:$true] %s302
          %308 = dma.hbm_to_vmem [thread:$0]  %s301, 4096, %s303, [#allocation9], 64, 64, 4
        $region28: #{tpu_custom_call.1} parent=11 // pred_fallthru
          _
      $region12: #{tpu_custom_call.1} parent=5 // pred_fallthru
        _
      %p309 = scmp.lt.s32.totalorder %s26, 2
      // Predicated region
      $region29: #{tpu_custom_call.1} parent=5 // pred_check
        %p310 = pneg %p309
      $region30: #{tpu_custom_call.1} parent=5 // pred_check_branch
        %312 = sbr.rel (%p310) target = $region32
      $region31: #{tpu_custom_call.1} parent=5 // pred_region
        // Predicated region
        $region33: #{tpu_custom_call.1} parent=31 // pred_check
          %p313 = pneg %p46
        $region34: #{tpu_custom_call.1} parent=31 // pred_check_branch
          %315 = sbr.rel (%p313) target = $region36
        $region35: #{tpu_custom_call.1} parent=31 // pred_region
          %s316 = sand.u32 %s36, 1
          %s317 = scalar_lea.sflag [#allocation3], %s316
          %s318 = sand.u32 %s36, 1
          %s319 = smul.addr %s318, 64
          %s320 = scalar_lea.vmem [#allocation2], %s319
          %s321 = smul.u32 8, %s26
          %323 = vsyncadd %s317, 0
          %s324 = smul.addr %s321, 8
          %s325 = scalar_lea.hbm %s0, %s324
          %s326 = sshll.u32 %s325, 4
          %s327 = int_to_ptr.hbm [resolvable:$true] %s326
          %s328 = sshll.u32 %s320, 4
          %s329 = int_to_ptr.vmem [resolvable:$true] %s328
          %334 = dma.hbm_to_vmem [thread:$0]  %s327, 1024, %s329, %s317, 128, 128, 8
        $region36: #{tpu_custom_call.1} parent=31 // pred_fallthru
          _
      $region32: #{tpu_custom_call.1} parent=5 // pred_fallthru
        _
      %p335 = scmp.le.s32.totalorder 1, %s26
      %p336 = scmp.lt.s32.totalorder %s26, 3
      %p337 = pnand %p335, %p336
      %p338 = pneg %p337
      // Predicated region
      $region37: #{tpu_custom_call.1} parent=5 // pred_check
        _
      $region38: #{tpu_custom_call.1} parent=5 // pred_check_branch
        %340 = sbr.rel (%p337) target = $region40
      $region39: #{tpu_custom_call.1} parent=5 // pred_region
        %s341 = ssub.s32 %s26, 1
        %s342 = sand.u32 %s39, 1
        %s343 = scalar_lea.sflag [#allocation3], %s342
        %s344 = sand.u32 %s39, 1
        %s345 = smul.addr %s344, 64
        %s346 = scalar_lea.vmem [#allocation2], %s345
        // Predicated region
        $region41: #{tpu_custom_call.1} parent=39 // pred_check
          %p347 = pneg %p52
        $region42: #{tpu_custom_call.1} parent=39 // pred_check_branch
          %349 = sbr.rel (%p347) target = $region44
        $region43: #{tpu_custom_call.1} parent=39 // pred_region
          %351 = dma.done %s343, 1024
        $region44: #{tpu_custom_call.1} parent=39 // pred_fallthru
          _
        // Predicated region
        $region45: #{tpu_custom_call.1} parent=39 // pred_check
          %p352 = pneg %p73
        $region46: #{tpu_custom_call.1} parent=39 // pred_check_branch
          %354 = sbr.rel (%p352) target = $region48
        $region47: #{tpu_custom_call.1} parent=39 // pred_region
          %356 = dma.done [#allocation6], 4096
        $region48: #{tpu_custom_call.1} parent=39 // pred_fallthru
          _
        // Predicated region
        $region49: #{tpu_custom_call.1} parent=39 // pred_check
          %p357 = pneg %p94
        $region50: #{tpu_custom_call.1} parent=39 // pred_check_branch
          %359 = sbr.rel (%p357) target = $region52
        $region51: #{tpu_custom_call.1} parent=39 // pred_region
          %361 = dma.done [#allocation6], 64
        $region52: #{tpu_custom_call.1} parent=39 // pred_fallthru
          _
        // Predicated region
        $region53: #{tpu_custom_call.1} parent=39 // pred_check
          %p362 = pneg %p115
        $region54: #{tpu_custom_call.1} parent=39 // pred_check_branch
          %364 = sbr.rel (%p362) target = $region56
        $region55: #{tpu_custom_call.1} parent=39 // pred_region
          %366 = dma.done [#allocation9], 4096
        $region56: #{tpu_custom_call.1} parent=39 // pred_fallthru
          _
        // Predicated region
        $region57: #{tpu_custom_call.1} parent=39 // pred_check
          %p367 = pneg %p136
        $region58: #{tpu_custom_call.1} parent=39 // pred_check_branch
          %369 = sbr.rel (%p367) target = $region60
        $region59: #{tpu_custom_call.1} parent=39 // pred_region
          %371 = dma.done [#allocation9], 4096
        $region60: #{tpu_custom_call.1} parent=39 // pred_fallthru
          _
        %s372 = sand.u32 %s39, 1
        %s373 = scalar_lea.sflag [#allocation3], %s372
        %s374 = sand.u32 %s39, 1
        %s375 = smul.addr %s374, 64
        %s376 = scalar_lea.vmem [#allocation2], %s375
        %p377 = pneg %p52
        %p378 = pneg %p49
        %p379 = pneg %p73
        %p380 = pneg %p70
        %p381 = pneg %p94
        %p382 = pneg %p91
        %p383 = pneg %p115
        %p384 = pneg %p112
        %p385 = pneg %p136
        %p386 = pneg %p133
        %p387 = pneg %p162
        %p388 = pneg %p159
        %s389 = sand.u32 %s149, 1
        %s390 = scalar_lea.sflag [#allocation4], %s389
        %s391 = sand.u32 %s149, 1
        %s392 = smul.addr %s391, 64
        %s393 = scalar_lea.vmem [#allocation11], %s392
        %p394 = pneg %p188
        %p395 = pneg %p185
        %s396 = smul.u32 8, %s31
        %p397 = scmp.lt.s32.totalorder %s396, 15
        %s398 = scalar_select %p397, %s396, 15
        %s399 = smul.addr %s398, 8
        %s400 = scalar_lea.vmem %s6, %s399
        %p401 = pneg %p214
        %p402 = pneg %p211
        %s403 = sand.u32 %s31, 1
        %s404 = scalar_lea.sflag [#allocation13], %s403
        %s405 = sand.u32 %s201, 1
        %s406 = smul.addr %s405, 32
        %s407 = scalar_lea.vmem [#allocation12], %s406
        %p408 = pneg %p240
        %p409 = pneg %p237
        %s410 = sand.u32 %s31, 1
        %s411 = scalar_lea.sflag [#allocation13], %s410
        %s412 = sand.u32 %s227, 1
        %s413 = smul.addr %s412, 8
        %s414 = scalar_lea.vmem [#allocation14], %s413
        %s415 = smul.u32 8, %s31
        %s416 = smul.u32 8, %s31
        %s417 = smul.u32 8, %s31
        %p418 = scmp.lt.s32.totalorder %s417, 15
        %s419 = scalar_select %p418, %s417, 15
        %s420 = smul.addr %s419, 8
        %s421 = scalar_lea.vmem %s6, %s420
        %s422 = smul.u32 8, %s31
        %v423 = vld [vmem:[%s346] sm:$0xff]
        %v424 = vld [vmem:[%s346 + $0x8] sm:$0xff]
        %v425 = vld [vmem:[%s346 + $0x10] sm:$0xff]
        %v426 = vld [vmem:[%s346 + $0x18] sm:$0xff]
        %v427 = vld [vmem:[%s346 + $0x20] sm:$0xff]
        %v428 = vld [vmem:[%s346 + $0x28] sm:$0xff]
        %v429 = vld [vmem:[%s346 + $0x30] sm:$0xff]
        %v430 = vld [vmem:[%s346 + $0x38] sm:$0xff]
        %v431 = vpack.c.bf16 %v424, %v423
        %v432 = vpack.c.bf16 %v426, %v425
        %v433 = vpack.c.bf16 %v428, %v427
        %v434 = vpack.c.bf16 %v430, %v429
        %v435 = vld [vmem:[#allocation5] sm:$0xff]
        %v436 = vld [vmem:[#allocation5 + $0x8] sm:$0xff]
        %v437 = vld [vmem:[#allocation5 + $0x10] sm:$0xff]
        %v438 = vld [vmem:[#allocation5 + $0x18] sm:$0xff]
        %v439 = vld [vmem:[#allocation5 + $0x20] sm:$0xff]
        %v440 = vld [vmem:[#allocation5 + $0x28] sm:$0xff]
        %v441 = vld [vmem:[#allocation5 + $0x30] sm:$0xff]
        %v442 = vld [vmem:[#allocation5 + $0x38] sm:$0xff]
        %v443 = vld [vmem:[#allocation5 + $0x40] sm:$0xff]
        %v444 = vld [vmem:[#allocation5 + $0x48] sm:$0xff]
        %v445 = vld [vmem:[#allocation5 + $0x50] sm:$0xff]
        %v446 = vld [vmem:[#allocation5 + $0x58] sm:$0xff]
        %v447 = vld [vmem:[#allocation5 + $0x60] sm:$0xff]
        %v448 = vld [vmem:[#allocation5 + $0x68] sm:$0xff]
        %v449 = vld [vmem:[#allocation5 + $0x70] sm:$0xff]
        %v450 = vld [vmem:[#allocation5 + $0x78] sm:$0xff]
        %v451 = vld [vmem:[#allocation5 + $0x80] sm:$0xff]
        %v452 = vld [vmem:[#allocation5 + $0x88] sm:$0xff]
        %v453 = vld [vmem:[#allocation5 + $0x90] sm:$0xff]
        %v454 = vld [vmem:[#allocation5 + $0x98] sm:$0xff]
        %v455 = vld [vmem:[#allocation5 + $0xa0] sm:$0xff]
        %v456 = vld [vmem:[#allocation5 + $0xa8] sm:$0xff]
        %v457 = vld [vmem:[#allocation5 + $0xb0] sm:$0xff]
        %v458 = vld [vmem:[#allocation5 + $0xb8] sm:$0xff]
        %v459 = vld [vmem:[#allocation5 + $0xc0] sm:$0xff]
        %v460 = vld [vmem:[#allocation5 + $0xc8] sm:$0xff]
        %v461 = vld [vmem:[#allocation5 + $0xd0] sm:$0xff]
        %v462 = vld [vmem:[#allocation5 + $0xd8] sm:$0xff]
        %v463 = vld [vmem:[#allocation5 + $0xe0] sm:$0xff]
        %v464 = vld [vmem:[#allocation5 + $0xe8] sm:$0xff]
        %v465 = vld [vmem:[#allocation5 + $0xf0] sm:$0xff]
        %v466 = vld [vmem:[#allocation5 + $0xf8] sm:$0xff]
        %v499 = vunpack.c.l.b16 %v435
        %v500 = vunpack.c.h.b16 %v435
        %v501 = vunpack.c.l.b16 %v436
        %v502 = vunpack.c.h.b16 %v436
        %v503 = vunpack.c.l.b16 %v437
        %v504 = vunpack.c.h.b16 %v437
        %v505 = vunpack.c.l.b16 %v438
        %v506 = vunpack.c.h.b16 %v438
        %v507 = vunpack.c.l.b16 %v439
        %v508 = vunpack.c.h.b16 %v439
        %v509 = vunpack.c.l.b16 %v440
        %v510 = vunpack.c.h.b16 %v440
        %v511 = vunpack.c.l.b16 %v441
        %v512 = vunpack.c.h.b16 %v441
        %v513 = vunpack.c.l.b16 %v442
        %v514 = vunpack.c.h.b16 %v442
        %v515 = vunpack.c.l.b16 %v443
        %v516 = vunpack.c.h.b16 %v443
        %v517 = vunpack.c.l.b16 %v444
        %v518 = vunpack.c.h.b16 %v444
        %v519 = vunpack.c.l.b16 %v445
        %v520 = vunpack.c.h.b16 %v445
        %v521 = vunpack.c.l.b16 %v446
        %v522 = vunpack.c.h.b16 %v446
        %v523 = vunpack.c.l.b16 %v447
        %v524 = vunpack.c.h.b16 %v447
        %v525 = vunpack.c.l.b16 %v448
        %v526 = vunpack.c.h.b16 %v448
        %v527 = vunpack.c.l.b16 %v449
        %v528 = vunpack.c.h.b16 %v449
        %v529 = vunpack.c.l.b16 %v450
        %v530 = vunpack.c.h.b16 %v450
        %v531 = vunpack.c.l.b16 %v451
        %v532 = vunpack.c.h.b16 %v451
        %v533 = vunpack.c.l.b16 %v452
        %v534 = vunpack.c.h.b16 %v452
        %v535 = vunpack.c.l.b16 %v453
        %v536 = vunpack.c.h.b16 %v453
        %v537 = vunpack.c.l.b16 %v454
        %v538 = vunpack.c.h.b16 %v454
        %v539 = vunpack.c.l.b16 %v455
        %v540 = vunpack.c.h.b16 %v455
        %v541 = vunpack.c.l.b16 %v456
        %v542 = vunpack.c.h.b16 %v456
        %v543 = vunpack.c.l.b16 %v457
        %v544 = vunpack.c.h.b16 %v457
        %v545 = vunpack.c.l.b16 %v458
        %v546 = vunpack.c.h.b16 %v458
        %v547 = vunpack.c.l.b16 %v459
        %v548 = vunpack.c.h.b16 %v459
        %v549 = vunpack.c.l.b16 %v460
        %v550 = vunpack.c.h.b16 %v460
        %v551 = vunpack.c.l.b16 %v461
        %v552 = vunpack.c.h.b16 %v461
        %v553 = vunpack.c.l.b16 %v462
        %v554 = vunpack.c.h.b16 %v462
        %v555 = vunpack.c.l.b16 %v463
        %v556 = vunpack.c.h.b16 %v463
        %v557 = vunpack.c.l.b16 %v464
        %v558 = vunpack.c.h.b16 %v464
        %v559 = vunpack.c.l.b16 %v465
        %v560 = vunpack.c.h.b16 %v465
        %v561 = vunpack.c.l.b16 %v466
        %v562 = vunpack.c.h.b16 %v466
        %v563 = vpack.c.b16 %v503, %v499
        %v564 = vpack.c.b16 %v504, %v500
        %v565 = vpack.c.b16 %v505, %v501
        %v566 = vpack.c.b16 %v506, %v502
        %v567 = vpack.c.b16 %v511, %v507
        %v568 = vpack.c.b16 %v512, %v508
        %v569 = vpack.c.b16 %v513, %v509
        %v570 = vpack.c.b16 %v514, %v510
        %v571 = vpack.c.b16 %v519, %v515
        %v572 = vpack.c.b16 %v520, %v516
        %v573 = vpack.c.b16 %v521, %v517
        %v574 = vpack.c.b16 %v522, %v518
        %v575 = vpack.c.b16 %v527, %v523
        %v576 = vpack.c.b16 %v528, %v524
        %v577 = vpack.c.b16 %v529, %v525
        %v578 = vpack.c.b16 %v530, %v526
        %v579 = vpack.c.b16 %v535, %v531
        %v580 = vpack.c.b16 %v536, %v532
        %v581 = vpack.c.b16 %v537, %v533
        %v582 = vpack.c.b16 %v538, %v534
        %v583 = vpack.c.b16 %v543, %v539
        %v584 = vpack.c.b16 %v544, %v540
        %v585 = vpack.c.b16 %v545, %v541
        %v586 = vpack.c.b16 %v546, %v542
        %v587 = vpack.c.b16 %v551, %v547
        %v588 = vpack.c.b16 %v552, %v548
        %v589 = vpack.c.b16 %v553, %v549
        %v590 = vpack.c.b16 %v554, %v550
        %v591 = vpack.c.b16 %v559, %v555
        %v592 = vpack.c.b16 %v560, %v556
        %v593 = vpack.c.b16 %v561, %v557
        %v594 = vpack.c.b16 %v562, %v558
        %627 = vmatpush.bf16.msra.mxu0 %v591
        %628 = vmatpush.bf16.msra.mxu0 %v587
        %629 = vmatpush.bf16.msra.mxu0 %v583
        %630 = vmatpush.bf16.msra.mxu0 %v579
        %631 = vmatpush.bf16.msra.mxu0 %v575
        %632 = vmatpush.bf16.msra.mxu0 %v571
        %633 = vmatpush.bf16.msra.mxu0 %v567
        %634 = vmatpush.bf16.msra.mxu0 %v563
        %635 = vmatmul.bf16.gmra.mxu0 %v431
        %v636 = vpop.f32.mrf.mxu0
        %v637 = vadd.f32 0.0, %v636
        %v638 = vpop.f32.mrf.mxu0
        %v639 = vadd.f32 0.0, %v638
        %640 = vmatmul.bf16.gmra.mxu0 %v432
        %v641 = vpop.f32.mrf.mxu0
        %v642 = vadd.f32 0.0, %v641
        %v643 = vpop.f32.mrf.mxu0
        %v644 = vadd.f32 0.0, %v643
        %645 = vmatmul.bf16.gmra.mxu0 %v433
        %v646 = vpop.f32.mrf.mxu0
        %v647 = vadd.f32 0.0, %v646
        %v648 = vpop.f32.mrf.mxu0
        %v649 = vadd.f32 0.0, %v648
        %650 = vmatmul.bf16.gmra.mxu0 %v434
        %v651 = vpop.f32.mrf.mxu0
        %v652 = vadd.f32 0.0, %v651
        %v653 = vpop.f32.mrf.mxu0
        %v654 = vadd.f32 0.0, %v653
        %655 = vdwg.mxu0
        %656 = vmatpush.bf16.msra.mxu0 %v592
        %657 = vmatpush.bf16.msra.mxu0 %v588
        %658 = vmatpush.bf16.msra.mxu0 %v584
        %659 = vmatpush.bf16.msra.mxu0 %v580
        %660 = vmatpush.bf16.msra.mxu0 %v576
        %661 = vmatpush.bf16.msra.mxu0 %v572
        %662 = vmatpush.bf16.msra.mxu0 %v568
        %663 = vmatpush.bf16.msra.mxu0 %v564
        %664 = vmatmul.bf16.gmra.mxu0 %v431
        %v665 = vpop.f32.mrf.mxu0
        %v666 = vadd.f32 0.0, %v665
        %v667 = vpop.f32.mrf.mxu0
        %v668 = vadd.f32 0.0, %v667
        %669 = vmatmul.bf16.gmra.mxu0 %v432
        %v670 = vpop.f32.mrf.mxu0
        %v671 = vadd.f32 0.0, %v670
        %v672 = vpop.f32.mrf.mxu0
        %v673 = vadd.f32 0.0, %v672
        %674 = vmatmul.bf16.gmra.mxu0 %v433
        %v675 = vpop.f32.mrf.mxu0
        %v676 = vadd.f32 0.0, %v675
        %v677 = vpop.f32.mrf.mxu0
        %v678 = vadd.f32 0.0, %v677
        %679 = vmatmul.bf16.gmra.mxu0 %v434
        %v680 = vpop.f32.mrf.mxu0
        %v681 = vadd.f32 0.0, %v680
        %v682 = vpop.f32.mrf.mxu0
        %v683 = vadd.f32 0.0, %v682
        %684 = vdwg.mxu0
        %685 = vmatpush.bf16.msra.mxu0 %v593
        %686 = vmatpush.bf16.msra.mxu0 %v589
        %687 = vmatpush.bf16.msra.mxu0 %v585
        %688 = vmatpush.bf16.msra.mxu0 %v581
        %689 = vmatpush.bf16.msra.mxu0 %v577
        %690 = vmatpush.bf16.msra.mxu0 %v573
        %691 = vmatpush.bf16.msra.mxu0 %v569
        %692 = vmatpush.bf16.msra.mxu0 %v565
        %693 = vmatmul.bf16.gmra.mxu0 %v431
        %v694 = vpop.f32.mrf.mxu0
        %v695 = vadd.f32 0.0, %v694
        %v696 = vpop.f32.mrf.mxu0
        %v697 = vadd.f32 0.0, %v696
        %698 = vmatmul.bf16.gmra.mxu0 %v432
        %v699 = vpop.f32.mrf.mxu0
        %v700 = vadd.f32 0.0, %v699
        %v701 = vpop.f32.mrf.mxu0
        %v702 = vadd.f32 0.0, %v701
        %703 = vmatmul.bf16.gmra.mxu0 %v433
        %v704 = vpop.f32.mrf.mxu0
        %v705 = vadd.f32 0.0, %v704
        %v706 = vpop.f32.mrf.mxu0
        %v707 = vadd.f32 0.0, %v706
        %708 = vmatmul.bf16.gmra.mxu0 %v434
        %v709 = vpop.f32.mrf.mxu0
        %v710 = vadd.f32 0.0, %v709
        %v711 = vpop.f32.mrf.mxu0
        %v712 = vadd.f32 0.0, %v711
        %713 = vdwg.mxu0
        %714 = vmatpush.bf16.msra.mxu0 %v594
        %715 = vmatpush.bf16.msra.mxu0 %v590
        %716 = vmatpush.bf16.msra.mxu0 %v586
        %717 = vmatpush.bf16.msra.mxu0 %v582
        %718 = vmatpush.bf16.msra.mxu0 %v578
        %719 = vmatpush.bf16.msra.mxu0 %v574
        %720 = vmatpush.bf16.msra.mxu0 %v570
        %721 = vmatpush.bf16.msra.mxu0 %v566
        %722 = vmatmul.bf16.gmra.mxu0 %v431
        %v723 = vpop.f32.mrf.mxu0
        %v724 = vadd.f32 0.0, %v723
        %v725 = vpop.f32.mrf.mxu0
        %v726 = vadd.f32 0.0, %v725
        %727 = vmatmul.bf16.gmra.mxu0 %v432
        %v728 = vpop.f32.mrf.mxu0
        %v729 = vadd.f32 0.0, %v728
        %v730 = vpop.f32.mrf.mxu0
        %v731 = vadd.f32 0.0, %v730
        %732 = vmatmul.bf16.gmra.mxu0 %v433
        %v733 = vpop.f32.mrf.mxu0
        %v734 = vadd.f32 0.0, %v733
        %v735 = vpop.f32.mrf.mxu0
        %v736 = vadd.f32 0.0, %v735
        %737 = vmatmul.bf16.gmra.mxu0 %v434
        %v738 = vpop.f32.mrf.mxu0
        %v739 = vadd.f32 0.0, %v738
        %v740 = vpop.f32.mrf.mxu0
        %v741 = vadd.f32 0.0, %v740
        %742 = vdwg.mxu0
        %v743 = vld [vmem:[#allocation7] sm:$0xf]
        %v745 = vperm.slane %v743, 0
        %v746 = vperm.slane %v743, 1
        %v747 = vperm.slane %v743, 2
        %v748 = vperm.slane %v743, 3
        %v753 = vsub.f32 %v745, %v637
        %v754 = vsub.f32 %v746, %v666
        %v755 = vsub.f32 %v747, %v695
        %v756 = vsub.f32 %v748, %v724
        %v757 = vsub.f32 %v745, %v639
        %v758 = vsub.f32 %v746, %v668
        %v759 = vsub.f32 %v747, %v697
        %v760 = vsub.f32 %v748, %v726
        %v761 = vsub.f32 %v745, %v642
        %v762 = vsub.f32 %v746, %v671
        %v763 = vsub.f32 %v747, %v700
        %v764 = vsub.f32 %v748, %v729
        %v765 = vsub.f32 %v745, %v644
        %v766 = vsub.f32 %v746, %v673
        %v767 = vsub.f32 %v747, %v702
        %v768 = vsub.f32 %v748, %v731
        %v769 = vsub.f32 %v745, %v647
        %v770 = vsub.f32 %v746, %v676
        %v771 = vsub.f32 %v747, %v705
        %v772 = vsub.f32 %v748, %v734
        %v773 = vsub.f32 %v745, %v649
        %v774 = vsub.f32 %v746, %v678
        %v775 = vsub.f32 %v747, %v707
        %v776 = vsub.f32 %v748, %v736
        %v777 = vsub.f32 %v745, %v652
        %v778 = vsub.f32 %v746, %v681
        %v779 = vsub.f32 %v747, %v710
        %v780 = vsub.f32 %v748, %v739
        %v781 = vsub.f32 %v745, %v654
        %v782 = vsub.f32 %v746, %v683
        %v783 = vsub.f32 %v747, %v712
        %v784 = vsub.f32 %v748, %v741
        %v785 = vlaneseq
        %v786 = vand.u32 %v785, 127
        %v787 = vadd.s32 %v786, 128
        %v788 = vadd.s32 %v786, 256
        %v789 = vadd.s32 %v786, 384
        %790 = vmin.xlane.f32.xlu0 %v753
        %v791 = vpop.xlane.xlu0 %790
        %792 = vmin.xlane.f32.xlu0 %v757
        %v793 = vpop.xlane.xlu0 %792
        %794 = vmin.xlane.f32.xlu0 %v761
        %v795 = vpop.xlane.xlu0 %794
        %796 = vmin.xlane.f32.xlu0 %v765
        %v797 = vpop.xlane.xlu0 %796
        %798 = vmin.xlane.f32.xlu0 %v769
        %v799 = vpop.xlane.xlu0 %798
        %800 = vmin.xlane.f32.xlu0 %v773
        %v801 = vpop.xlane.xlu0 %800
        %802 = vmin.xlane.f32.xlu0 %v777
        %v803 = vpop.xlane.xlu0 %802
        %804 = vmin.xlane.f32.xlu0 %v781
        %v805 = vpop.xlane.xlu0 %804
        %vm806 = vcmp.le.f32.partialorder %v753, %v791
        %vm807 = vcmp.le.f32.partialorder %v757, %v793
        %vm808 = vcmp.le.f32.partialorder %v761, %v795
        %vm809 = vcmp.le.f32.partialorder %v765, %v797
        %vm810 = vcmp.le.f32.partialorder %v769, %v799
        %vm811 = vcmp.le.f32.partialorder %v773, %v801
        %vm812 = vcmp.le.f32.partialorder %v777, %v803
        %vm813 = vcmp.le.f32.partialorder %v781, %v805
        %v814 = vsel %vm806, %v786, 128
        %v815 = vsel %vm807, %v786, 128
        %v816 = vsel %vm808, %v786, 128
        %v817 = vsel %vm809, %v786, 128
        %v818 = vsel %vm810, %v786, 128
        %v819 = vsel %vm811, %v786, 128
        %v820 = vsel %vm812, %v786, 128
        %v821 = vsel %vm813, %v786, 128
        %v822 = vand.u32 %v814, 65535
        %v823 = vshra.s32 %v814, 16
        %v824 = vcvt.s32.f32 %v822
        %v825 = vcvt.s32.f32 %v823
        %826 = vmin.xlane.f32.xlu0 %v825
        %v827 = vpop.xlane.xlu0 %826
        %vm828 = vcmp.eq.f32.partialorder %v825, %v827
        %v829 = vsel %vm828, %v824, inf
        %830 = vmin.xlane.f32.xlu0 %v829
        %v831 = vpop.xlane.xlu0 %830
        %v832 = vcvt.f32.s32 %v831
        %v833 = vcvt.f32.s32 %v827
        %v834 = vshll.u32 %v833, 16
        %v835 = vadd.s32 %v834, %v832
        %v836 = vand.u32 %v815, 65535
        %v837 = vshra.s32 %v815, 16
        %v838 = vcvt.s32.f32 %v836
        %v839 = vcvt.s32.f32 %v837
        %840 = vmin.xlane.f32.xlu0 %v839
        %v841 = vpop.xlane.xlu0 %840
        %vm842 = vcmp.eq.f32.partialorder %v839, %v841
        %v843 = vsel %vm842, %v838, inf
        %844 = vmin.xlane.f32.xlu0 %v843
        %v845 = vpop.xlane.xlu0 %844
        %v846 = vcvt.f32.s32 %v845
        %v847 = vcvt.f32.s32 %v841
        %v848 = vshll.u32 %v847, 16
        %v849 = vadd.s32 %v848, %v846
        %v850 = vand.u32 %v816, 65535
        %v851 = vshra.s32 %v816, 16
        %v852 = vcvt.s32.f32 %v850
        %v853 = vcvt.s32.f32 %v851
        %854 = vmin.xlane.f32.xlu0 %v853
        %v855 = vpop.xlane.xlu0 %854
        %vm856 = vcmp.eq.f32.partialorder %v853, %v855
        %v857 = vsel %vm856, %v852, inf
        %858 = vmin.xlane.f32.xlu0 %v857
        %v859 = vpop.xlane.xlu0 %858
        %v860 = vcvt.f32.s32 %v859
        %v861 = vcvt.f32.s32 %v855
        %v862 = vshll.u32 %v861, 16
        %v863 = vadd.s32 %v862, %v860
        %v864 = vand.u32 %v817, 65535
        %v865 = vshra.s32 %v817, 16
        %v866 = vcvt.s32.f32 %v864
        %v867 = vcvt.s32.f32 %v865
        %868 = vmin.xlane.f32.xlu0 %v867
        %v869 = vpop.xlane.xlu0 %868
        %vm870 = vcmp.eq.f32.partialorder %v867, %v869
        %v871 = vsel %vm870, %v866, inf
        %872 = vmin.xlane.f32.xlu0 %v871
        %v873 = vpop.xlane.xlu0 %872
        %v874 = vcvt.f32.s32 %v873
        %v875 = vcvt.f32.s32 %v869
        %v876 = vshll.u32 %v875, 16
        %v877 = vadd.s32 %v876, %v874
        %v878 = vand.u32 %v818, 65535
        %v879 = vshra.s32 %v818, 16
        %v880 = vcvt.s32.f32 %v878
        %v881 = vcvt.s32.f32 %v879
        %882 = vmin.xlane.f32.xlu0 %v881
        %v883 = vpop.xlane.xlu0 %882
        %vm884 = vcmp.eq.f32.partialorder %v881, %v883
        %v885 = vsel %vm884, %v880, inf
        %886 = vmin.xlane.f32.xlu0 %v885
        %v887 = vpop.xlane.xlu0 %886
        %v888 = vcvt.f32.s32 %v887
        %v889 = vcvt.f32.s32 %v883
        %v890 = vshll.u32 %v889, 16
        %v891 = vadd.s32 %v890, %v888
        %v892 = vand.u32 %v819, 65535
        %v893 = vshra.s32 %v819, 16
        %v894 = vcvt.s32.f32 %v892
        %v895 = vcvt.s32.f32 %v893
        %896 = vmin.xlane.f32.xlu0 %v895
        %v897 = vpop.xlane.xlu0 %896
        %vm898 = vcmp.eq.f32.partialorder %v895, %v897
        %v899 = vsel %vm898, %v894, inf
        %900 = vmin.xlane.f32.xlu0 %v899
        %v901 = vpop.xlane.xlu0 %900
        %v902 = vcvt.f32.s32 %v901
        %v903 = vcvt.f32.s32 %v897
        %v904 = vshll.u32 %v903, 16
        %v905 = vadd.s32 %v904, %v902
        %v906 = vand.u32 %v820, 65535
        %v907 = vshra.s32 %v820, 16
        %v908 = vcvt.s32.f32 %v906
        %v909 = vcvt.s32.f32 %v907
        %910 = vmin.xlane.f32.xlu0 %v909
        %v911 = vpop.xlane.xlu0 %910
        %vm912 = vcmp.eq.f32.partialorder %v909, %v911
        %v913 = vsel %vm912, %v908, inf
        %914 = vmin.xlane.f32.xlu0 %v913
        %v915 = vpop.xlane.xlu0 %914
        %v916 = vcvt.f32.s32 %v915
        %v917 = vcvt.f32.s32 %v911
        %v918 = vshll.u32 %v917, 16
        %v919 = vadd.s32 %v918, %v916
        %v920 = vand.u32 %v821, 65535
        %v921 = vshra.s32 %v821, 16
        %v922 = vcvt.s32.f32 %v920
        %v923 = vcvt.s32.f32 %v921
        %924 = vmin.xlane.f32.xlu0 %v923
        %v925 = vpop.xlane.xlu0 %924
        %vm926 = vcmp.eq.f32.partialorder %v923, %v925
        %v927 = vsel %vm926, %v922, inf
        %928 = vmin.xlane.f32.xlu0 %v927
        %v929 = vpop.xlane.xlu0 %928
        %v930 = vcvt.f32.s32 %v929
        %v931 = vcvt.f32.s32 %v925
        %v932 = vshll.u32 %v931, 16
        %v933 = vadd.s32 %v932, %v930
        %vm934 = vcmp.eq.s32.totalorder %v786, 0
        %v935 = vsel %vm934, %v835, 0
        %v936 = vsel %vm934, %v849, 0
        %v937 = vsel %vm934, %v863, 0
        %v938 = vsel %vm934, %v877, 0
        %v939 = vsel %vm934, %v891, 0
        %v940 = vsel %vm934, %v905, 0
        %v941 = vsel %vm934, %v919, 0
        %v942 = vsel %vm934, %v933, 0
        %vm943 = vcmp.ge.s32.totalorder %v786, 0
        %vm944 = vcmp.ge.s32.totalorder %v787, 0
        %vm945 = vcmp.ge.s32.totalorder %v788, 0
        %vm946 = vcmp.ge.s32.totalorder %v789, 0
        %vm947 = vcmp.lt.s32.totalorder %v786, 128
        %vm948 = vcmp.lt.s32.totalorder %v787, 128
        %vm949 = vcmp.lt.s32.totalorder %v788, 128
        %vm950 = vcmp.lt.s32.totalorder %v789, 128
        %vm951 = vmand %vm943, %vm947
        %vm952 = vmand %vm944, %vm948
        %vm953 = vmand %vm945, %vm949
        %vm954 = vmand %vm946, %vm950
        %v955 = vsel %vm951, %v835, 4294967295
        %v956 = vsel %vm952, %v835, 4294967295
        %v957 = vsel %vm953, %v835, 4294967295
        %v958 = vsel %vm954, %v835, 4294967295
        %v959 = vsel %vm951, %v849, 4294967295
        %v960 = vsel %vm952, %v849, 4294967295
        %v961 = vsel %vm953, %v849, 4294967295
        %v962 = vsel %vm954, %v849, 4294967295
        %v963 = vsel %vm951, %v863, 4294967295
        %v964 = vsel %vm952, %v863, 4294967295
        %v965 = vsel %vm953, %v863, 4294967295
        %v966 = vsel %vm954, %v863, 4294967295
        %v967 = vsel %vm951, %v877, 4294967295
        %v968 = vsel %vm952, %v877, 4294967295
        %v969 = vsel %vm953, %v877, 4294967295
        %v970 = vsel %vm954, %v877, 4294967295
        %v971 = vsel %vm951, %v891, 4294967295
        %v972 = vsel %vm952, %v891, 4294967295
        %v973 = vsel %vm953, %v891, 4294967295
        %v974 = vsel %vm954, %v891, 4294967295
        %v975 = vsel %vm951, %v905, 4294967295
        %v976 = vsel %vm952, %v905, 4294967295
        %v977 = vsel %vm953, %v905, 4294967295
        %v978 = vsel %vm954, %v905, 4294967295
        %v979 = vsel %vm951, %v919, 4294967295
        %v980 = vsel %vm952, %v919, 4294967295
        %v981 = vsel %vm953, %v919, 4294967295
        %v982 = vsel %vm954, %v919, 4294967295
        %v983 = vsel %vm951, %v933, 4294967295
        %v984 = vsel %vm952, %v933, 4294967295
        %v985 = vsel %vm953, %v933, 4294967295
        %v986 = vsel %vm954, %v933, 4294967295
        %987 = vmin.xlane.f32.xlu0 %v754
        %v988 = vpop.xlane.xlu0 %987
        %989 = vmin.xlane.f32.xlu0 %v758
        %v990 = vpop.xlane.xlu0 %989
        %991 = vmin.xlane.f32.xlu0 %v762
        %v992 = vpop.xlane.xlu0 %991
        %993 = vmin.xlane.f32.xlu0 %v766
        %v994 = vpop.xlane.xlu0 %993
        %995 = vmin.xlane.f32.xlu0 %v770
        %v996 = vpop.xlane.xlu0 %995
        %997 = vmin.xlane.f32.xlu0 %v774
        %v998 = vpop.xlane.xlu0 %997
        %999 = vmin.xlane.f32.xlu0 %v778
        %v1000 = vpop.xlane.xlu0 %999
        %1001 = vmin.xlane.f32.xlu0 %v782
        %v1002 = vpop.xlane.xlu0 %1001
        %vm1003 = vcmp.le.f32.partialorder %v754, %v988
        %vm1004 = vcmp.le.f32.partialorder %v758, %v990
        %vm1005 = vcmp.le.f32.partialorder %v762, %v992
        %vm1006 = vcmp.le.f32.partialorder %v766, %v994
        %vm1007 = vcmp.le.f32.partialorder %v770, %v996
        %vm1008 = vcmp.le.f32.partialorder %v774, %v998
        %vm1009 = vcmp.le.f32.partialorder %v778, %v1000
        %vm1010 = vcmp.le.f32.partialorder %v782, %v1002
        %v1011 = vsel %vm1003, %v786, 128
        %v1012 = vsel %vm1004, %v786, 128
        %v1013 = vsel %vm1005, %v786, 128
        %v1014 = vsel %vm1006, %v786, 128
        %v1015 = vsel %vm1007, %v786, 128
        %v1016 = vsel %vm1008, %v786, 128
        %v1017 = vsel %vm1009, %v786, 128
        %v1018 = vsel %vm1010, %v786, 128
        %v1019 = vand.u32 %v1011, 65535
        %v1020 = vshra.s32 %v1011, 16
        %v1021 = vcvt.s32.f32 %v1019
        %v1022 = vcvt.s32.f32 %v1020
        %1023 = vmin.xlane.f32.xlu0 %v1022
        %v1024 = vpop.xlane.xlu0 %1023
        %vm1025 = vcmp.eq.f32.partialorder %v1022, %v1024
        %v1026 = vsel %vm1025, %v1021, inf
        %1027 = vmin.xlane.f32.xlu0 %v1026
        %v1028 = vpop.xlane.xlu0 %1027
        %v1029 = vcvt.f32.s32 %v1028
        %v1030 = vcvt.f32.s32 %v1024
        %v1031 = vshll.u32 %v1030, 16
        %v1032 = vadd.s32 %v1031, %v1029
        %v1033 = vand.u32 %v1012, 65535
        %v1034 = vshra.s32 %v1012, 16
        %v1035 = vcvt.s32.f32 %v1033
        %v1036 = vcvt.s32.f32 %v1034
        %1037 = vmin.xlane.f32.xlu0 %v1036
        %v1038 = vpop.xlane.xlu0 %1037
        %vm1039 = vcmp.eq.f32.partialorder %v1036, %v1038
        %v1040 = vsel %vm1039, %v1035, inf
        %1041 = vmin.xlane.f32.xlu0 %v1040
        %v1042 = vpop.xlane.xlu0 %1041
        %v1043 = vcvt.f32.s32 %v1042
        %v1044 = vcvt.f32.s32 %v1038
        %v1045 = vshll.u32 %v1044, 16
        %v1046 = vadd.s32 %v1045, %v1043
        %v1047 = vand.u32 %v1013, 65535
        %v1048 = vshra.s32 %v1013, 16
        %v1049 = vcvt.s32.f32 %v1047
        %v1050 = vcvt.s32.f32 %v1048
        %1051 = vmin.xlane.f32.xlu0 %v1050
        %v1052 = vpop.xlane.xlu0 %1051
        %vm1053 = vcmp.eq.f32.partialorder %v1050, %v1052
        %v1054 = vsel %vm1053, %v1049, inf
        %1055 = vmin.xlane.f32.xlu0 %v1054
        %v1056 = vpop.xlane.xlu0 %1055
        %v1057 = vcvt.f32.s32 %v1056
        %v1058 = vcvt.f32.s32 %v1052
        %v1059 = vshll.u32 %v1058, 16
        %v1060 = vadd.s32 %v1059, %v1057
        %v1061 = vand.u32 %v1014, 65535
        %v1062 = vshra.s32 %v1014, 16
        %v1063 = vcvt.s32.f32 %v1061
        %v1064 = vcvt.s32.f32 %v1062
        %1065 = vmin.xlane.f32.xlu0 %v1064
        %v1066 = vpop.xlane.xlu0 %1065
        %vm1067 = vcmp.eq.f32.partialorder %v1064, %v1066
        %v1068 = vsel %vm1067, %v1063, inf
        %1069 = vmin.xlane.f32.xlu0 %v1068
        %v1070 = vpop.xlane.xlu0 %1069
        %v1071 = vcvt.f32.s32 %v1070
        %v1072 = vcvt.f32.s32 %v1066
        %v1073 = vshll.u32 %v1072, 16
        %v1074 = vadd.s32 %v1073, %v1071
        %v1075 = vand.u32 %v1015, 65535
        %v1076 = vshra.s32 %v1015, 16
        %v1077 = vcvt.s32.f32 %v1075
        %v1078 = vcvt.s32.f32 %v1076
        %1079 = vmin.xlane.f32.xlu0 %v1078
        %v1080 = vpop.xlane.xlu0 %1079
        %vm1081 = vcmp.eq.f32.partialorder %v1078, %v1080
        %v1082 = vsel %vm1081, %v1077, inf
        %1083 = vmin.xlane.f32.xlu0 %v1082
        %v1084 = vpop.xlane.xlu0 %1083
        %v1085 = vcvt.f32.s32 %v1084
        %v1086 = vcvt.f32.s32 %v1080
        %v1087 = vshll.u32 %v1086, 16
        %v1088 = vadd.s32 %v1087, %v1085
        %v1089 = vand.u32 %v1016, 65535
        %v1090 = vshra.s32 %v1016, 16
        %v1091 = vcvt.s32.f32 %v1089
        %v1092 = vcvt.s32.f32 %v1090
        %1093 = vmin.xlane.f32.xlu0 %v1092
        %v1094 = vpop.xlane.xlu0 %1093
        %vm1095 = vcmp.eq.f32.partialorder %v1092, %v1094
        %v1096 = vsel %vm1095, %v1091, inf
        %1097 = vmin.xlane.f32.xlu0 %v1096
        %v1098 = vpop.xlane.xlu0 %1097
        %v1099 = vcvt.f32.s32 %v1098
        %v1100 = vcvt.f32.s32 %v1094
        %v1101 = vshll.u32 %v1100, 16
        %v1102 = vadd.s32 %v1101, %v1099
        %v1103 = vand.u32 %v1017, 65535
        %v1104 = vshra.s32 %v1017, 16
        %v1105 = vcvt.s32.f32 %v1103
        %v1106 = vcvt.s32.f32 %v1104
        %1107 = vmin.xlane.f32.xlu0 %v1106
        %v1108 = vpop.xlane.xlu0 %1107
        %vm1109 = vcmp.eq.f32.partialorder %v1106, %v1108
        %v1110 = vsel %vm1109, %v1105, inf
        %1111 = vmin.xlane.f32.xlu0 %v1110
        %v1112 = vpop.xlane.xlu0 %1111
        %v1113 = vcvt.f32.s32 %v1112
        %v1114 = vcvt.f32.s32 %v1108
        %v1115 = vshll.u32 %v1114, 16
        %v1116 = vadd.s32 %v1115, %v1113
        %v1117 = vand.u32 %v1018, 65535
        %v1118 = vshra.s32 %v1018, 16
        %v1119 = vcvt.s32.f32 %v1117
        %v1120 = vcvt.s32.f32 %v1118
        %1121 = vmin.xlane.f32.xlu0 %v1120
        %v1122 = vpop.xlane.xlu0 %1121
        %vm1123 = vcmp.eq.f32.partialorder %v1120, %v1122
        %v1124 = vsel %vm1123, %v1119, inf
        %1125 = vmin.xlane.f32.xlu0 %v1124
        %v1126 = vpop.xlane.xlu0 %1125
        %v1127 = vcvt.f32.s32 %v1126
        %v1128 = vcvt.f32.s32 %v1122
        %v1129 = vshll.u32 %v1128, 16
        %v1130 = vadd.s32 %v1129, %v1127
        %vm1131 = vcmp.eq.s32.totalorder %v786, 1
        %v1132 = vsel %vm1131, %v1032, %v935
        %v1133 = vsel %vm1131, %v1046, %v936
        %v1134 = vsel %vm1131, %v1060, %v937
        %v1135 = vsel %vm1131, %v1074, %v938
        %v1136 = vsel %vm1131, %v1088, %v939
        %v1137 = vsel %vm1131, %v1102, %v940
        %v1138 = vsel %vm1131, %v1116, %v941
        %v1139 = vsel %vm1131, %v1130, %v942
        %v1140 = vadd.s32 %v1032, 128
        %v1141 = vadd.s32 %v1046, 128
        %v1142 = vadd.s32 %v1060, 128
        %v1143 = vadd.s32 %v1074, 128
        %v1144 = vadd.s32 %v1088, 128
        %v1145 = vadd.s32 %v1102, 128
        %v1146 = vadd.s32 %v1116, 128
        %v1147 = vadd.s32 %v1130, 128
        %vm1148 = vcmp.ge.s32.totalorder %v786, 128
        %vm1149 = vcmp.ge.s32.totalorder %v787, 128
        %vm1150 = vcmp.ge.s32.totalorder %v788, 128
        %vm1151 = vcmp.ge.s32.totalorder %v789, 128
        %vm1152 = vcmp.lt.s32.totalorder %v786, 256
        %vm1153 = vcmp.lt.s32.totalorder %v787, 256
        %vm1154 = vcmp.lt.s32.totalorder %v788, 256
        %vm1155 = vcmp.lt.s32.totalorder %v789, 256
        %vm1156 = vmand %vm1148, %vm1152
        %vm1157 = vmand %vm1149, %vm1153
        %vm1158 = vmand %vm1150, %vm1154
        %vm1159 = vmand %vm1151, %vm1155
        %v1160 = vsel %vm1156, %v1140, %v955
        %v1161 = vsel %vm1157, %v1140, %v956
        %v1162 = vsel %vm1158, %v1140, %v957
        %v1163 = vsel %vm1159, %v1140, %v958
        %v1164 = vsel %vm1156, %v1141, %v959
        %v1165 = vsel %vm1157, %v1141, %v960
        %v1166 = vsel %vm1158, %v1141, %v961
        %v1167 = vsel %vm1159, %v1141, %v962
        %v1168 = vsel %vm1156, %v1142, %v963
        %v1169 = vsel %vm1157, %v1142, %v964
        %v1170 = vsel %vm1158, %v1142, %v965
        %v1171 = vsel %vm1159, %v1142, %v966
        %v1172 = vsel %vm1156, %v1143, %v967
        %v1173 = vsel %vm1157, %v1143, %v968
        %v1174 = vsel %vm1158, %v1143, %v969
        %v1175 = vsel %vm1159, %v1143, %v970
        %v1176 = vsel %vm1156, %v1144, %v971
        %v1177 = vsel %vm1157, %v1144, %v972
        %v1178 = vsel %vm1158, %v1144, %v973
        %v1179 = vsel %vm1159, %v1144, %v974
        %v1180 = vsel %vm1156, %v1145, %v975
        %v1181 = vsel %vm1157, %v1145, %v976
        %v1182 = vsel %vm1158, %v1145, %v977
        %v1183 = vsel %vm1159, %v1145, %v978
        %v1184 = vsel %vm1156, %v1146, %v979
        %v1185 = vsel %vm1157, %v1146, %v980
        %v1186 = vsel %vm1158, %v1146, %v981
        %v1187 = vsel %vm1159, %v1146, %v982
        %v1188 = vsel %vm1156, %v1147, %v983
        %v1189 = vsel %vm1157, %v1147, %v984
        %v1190 = vsel %vm1158, %v1147, %v985
        %v1191 = vsel %vm1159, %v1147, %v986
        %1192 = vmin.xlane.f32.xlu0 %v755
        %v1193 = vpop.xlane.xlu0 %1192
        %1194 = vmin.xlane.f32.xlu0 %v759
        %v1195 = vpop.xlane.xlu0 %1194
        %1196 = vmin.xlane.f32.xlu0 %v763
        %v1197 = vpop.xlane.xlu0 %1196
        %1198 = vmin.xlane.f32.xlu0 %v767
        %v1199 = vpop.xlane.xlu0 %1198
        %1200 = vmin.xlane.f32.xlu0 %v771
        %v1201 = vpop.xlane.xlu0 %1200
        %1202 = vmin.xlane.f32.xlu0 %v775
        %v1203 = vpop.xlane.xlu0 %1202
        %1204 = vmin.xlane.f32.xlu0 %v779
        %v1205 = vpop.xlane.xlu0 %1204
        %1206 = vmin.xlane.f32.xlu0 %v783
        %v1207 = vpop.xlane.xlu0 %1206
        %vm1208 = vcmp.le.f32.partialorder %v755, %v1193
        %vm1209 = vcmp.le.f32.partialorder %v759, %v1195
        %vm1210 = vcmp.le.f32.partialorder %v763, %v1197
        %vm1211 = vcmp.le.f32.partialorder %v767, %v1199
        %vm1212 = vcmp.le.f32.partialorder %v771, %v1201
        %vm1213 = vcmp.le.f32.partialorder %v775, %v1203
        %vm1214 = vcmp.le.f32.partialorder %v779, %v1205
        %vm1215 = vcmp.le.f32.partialorder %v783, %v1207
        %v1216 = vsel %vm1208, %v786, 128
        %v1217 = vsel %vm1209, %v786, 128
        %v1218 = vsel %vm1210, %v786, 128
        %v1219 = vsel %vm1211, %v786, 128
        %v1220 = vsel %vm1212, %v786, 128
        %v1221 = vsel %vm1213, %v786, 128
        %v1222 = vsel %vm1214, %v786, 128
        %v1223 = vsel %vm1215, %v786, 128
        %v1224 = vand.u32 %v1216, 65535
        %v1225 = vshra.s32 %v1216, 16
        %v1226 = vcvt.s32.f32 %v1224
        %v1227 = vcvt.s32.f32 %v1225
        %1228 = vmin.xlane.f32.xlu0 %v1227
        %v1229 = vpop.xlane.xlu0 %1228
        %vm1230 = vcmp.eq.f32.partialorder %v1227, %v1229
        %v1231 = vsel %vm1230, %v1226, inf
        %1232 = vmin.xlane.f32.xlu0 %v1231
        %v1233 = vpop.xlane.xlu0 %1232
        %v1234 = vcvt.f32.s32 %v1233
        %v1235 = vcvt.f32.s32 %v1229
        %v1236 = vshll.u32 %v1235, 16
        %v1237 = vadd.s32 %v1236, %v1234
        %v1238 = vand.u32 %v1217, 65535
        %v1239 = vshra.s32 %v1217, 16
        %v1240 = vcvt.s32.f32 %v1238
        %v1241 = vcvt.s32.f32 %v1239
        %1242 = vmin.xlane.f32.xlu0 %v1241
        %v1243 = vpop.xlane.xlu0 %1242
        %vm1244 = vcmp.eq.f32.partialorder %v1241, %v1243
        %v1245 = vsel %vm1244, %v1240, inf
        %1246 = vmin.xlane.f32.xlu0 %v1245
        %v1247 = vpop.xlane.xlu0 %1246
        %v1248 = vcvt.f32.s32 %v1247
        %v1249 = vcvt.f32.s32 %v1243
        %v1250 = vshll.u32 %v1249, 16
        %v1251 = vadd.s32 %v1250, %v1248
        %v1252 = vand.u32 %v1218, 65535
        %v1253 = vshra.s32 %v1218, 16
        %v1254 = vcvt.s32.f32 %v1252
        %v1255 = vcvt.s32.f32 %v1253
        %1256 = vmin.xlane.f32.xlu0 %v1255
        %v1257 = vpop.xlane.xlu0 %1256
        %vm1258 = vcmp.eq.f32.partialorder %v1255, %v1257
        %v1259 = vsel %vm1258, %v1254, inf
        %1260 = vmin.xlane.f32.xlu0 %v1259
        %v1261 = vpop.xlane.xlu0 %1260
        %v1262 = vcvt.f32.s32 %v1261
        %v1263 = vcvt.f32.s32 %v1257
        %v1264 = vshll.u32 %v1263, 16
        %v1265 = vadd.s32 %v1264, %v1262
        %v1266 = vand.u32 %v1219, 65535
        %v1267 = vshra.s32 %v1219, 16
        %v1268 = vcvt.s32.f32 %v1266
        %v1269 = vcvt.s32.f32 %v1267
        %1270 = vmin.xlane.f32.xlu0 %v1269
        %v1271 = vpop.xlane.xlu0 %1270
        %vm1272 = vcmp.eq.f32.partialorder %v1269, %v1271
        %v1273 = vsel %vm1272, %v1268, inf
        %1274 = vmin.xlane.f32.xlu0 %v1273
        %v1275 = vpop.xlane.xlu0 %1274
        %v1276 = vcvt.f32.s32 %v1275
        %v1277 = vcvt.f32.s32 %v1271
        %v1278 = vshll.u32 %v1277, 16
        %v1279 = vadd.s32 %v1278, %v1276
        %v1280 = vand.u32 %v1220, 65535
        %v1281 = vshra.s32 %v1220, 16
        %v1282 = vcvt.s32.f32 %v1280
        %v1283 = vcvt.s32.f32 %v1281
        %1284 = vmin.xlane.f32.xlu0 %v1283
        %v1285 = vpop.xlane.xlu0 %1284
        %vm1286 = vcmp.eq.f32.partialorder %v1283, %v1285
        %v1287 = vsel %vm1286, %v1282, inf
        %1288 = vmin.xlane.f32.xlu0 %v1287
        %v1289 = vpop.xlane.xlu0 %1288
        %v1290 = vcvt.f32.s32 %v1289
        %v1291 = vcvt.f32.s32 %v1285
        %v1292 = vshll.u32 %v1291, 16
        %v1293 = vadd.s32 %v1292, %v1290
        %v1294 = vand.u32 %v1221, 65535
        %v1295 = vshra.s32 %v1221, 16
        %v1296 = vcvt.s32.f32 %v1294
        %v1297 = vcvt.s32.f32 %v1295
        %1298 = vmin.xlane.f32.xlu0 %v1297
        %v1299 = vpop.xlane.xlu0 %1298
        %vm1300 = vcmp.eq.f32.partialorder %v1297, %v1299
        %v1301 = vsel %vm1300, %v1296, inf
        %1302 = vmin.xlane.f32.xlu0 %v1301
        %v1303 = vpop.xlane.xlu0 %1302
        %v1304 = vcvt.f32.s32 %v1303
        %v1305 = vcvt.f32.s32 %v1299
        %v1306 = vshll.u32 %v1305, 16
        %v1307 = vadd.s32 %v1306, %v1304
        %v1308 = vand.u32 %v1222, 65535
        %v1309 = vshra.s32 %v1222, 16
        %v1310 = vcvt.s32.f32 %v1308
        %v1311 = vcvt.s32.f32 %v1309
        %1312 = vmin.xlane.f32.xlu0 %v1311
        %v1313 = vpop.xlane.xlu0 %1312
        %vm1314 = vcmp.eq.f32.partialorder %v1311, %v1313
        %v1315 = vsel %vm1314, %v1310, inf
        %1316 = vmin.xlane.f32.xlu0 %v1315
        %v1317 = vpop.xlane.xlu0 %1316
        %v1318 = vcvt.f32.s32 %v1317
        %v1319 = vcvt.f32.s32 %v1313
        %v1320 = vshll.u32 %v1319, 16
        %v1321 = vadd.s32 %v1320, %v1318
        %v1322 = vand.u32 %v1223, 65535
        %v1323 = vshra.s32 %v1223, 16
        %v1324 = vcvt.s32.f32 %v1322
        %v1325 = vcvt.s32.f32 %v1323
        %1326 = vmin.xlane.f32.xlu0 %v1325
        %v1327 = vpop.xlane.xlu0 %1326
        %vm1328 = vcmp.eq.f32.partialorder %v1325, %v1327
        %v1329 = vsel %vm1328, %v1324, inf
        %1330 = vmin.xlane.f32.xlu0 %v1329
        %v1331 = vpop.xlane.xlu0 %1330
        %v1332 = vcvt.f32.s32 %v1331
        %v1333 = vcvt.f32.s32 %v1327
        %v1334 = vshll.u32 %v1333, 16
        %v1335 = vadd.s32 %v1334, %v1332
        %vm1336 = vcmp.eq.s32.totalorder %v786, 2
        %v1337 = vsel %vm1336, %v1237, %v1132
        %v1338 = vsel %vm1336, %v1251, %v1133
        %v1339 = vsel %vm1336, %v1265, %v1134
        %v1340 = vsel %vm1336, %v1279, %v1135
        %v1341 = vsel %vm1336, %v1293, %v1136
        %v1342 = vsel %vm1336, %v1307, %v1137
        %v1343 = vsel %vm1336, %v1321, %v1138
        %v1344 = vsel %vm1336, %v1335, %v1139
        %v1345 = vadd.s32 %v1237, 256
        %v1346 = vadd.s32 %v1251, 256
        %v1347 = vadd.s32 %v1265, 256
        %v1348 = vadd.s32 %v1279, 256
        %v1349 = vadd.s32 %v1293, 256
        %v1350 = vadd.s32 %v1307, 256
        %v1351 = vadd.s32 %v1321, 256
        %v1352 = vadd.s32 %v1335, 256
        %vm1353 = vcmp.ge.s32.totalorder %v786, 256
        %vm1354 = vcmp.ge.s32.totalorder %v787, 256
        %vm1355 = vcmp.ge.s32.totalorder %v788, 256
        %vm1356 = vcmp.ge.s32.totalorder %v789, 256
        %vm1357 = vcmp.lt.s32.totalorder %v786, 384
        %vm1358 = vcmp.lt.s32.totalorder %v787, 384
        %vm1359 = vcmp.lt.s32.totalorder %v788, 384
        %vm1360 = vcmp.lt.s32.totalorder %v789, 384
        %vm1361 = vmand %vm1353, %vm1357
        %vm1362 = vmand %vm1354, %vm1358
        %vm1363 = vmand %vm1355, %vm1359
        %vm1364 = vmand %vm1356, %vm1360
        %v1365 = vsel %vm1361, %v1345, %v1160
        %v1366 = vsel %vm1362, %v1345, %v1161
        %v1367 = vsel %vm1363, %v1345, %v1162
        %v1368 = vsel %vm1364, %v1345, %v1163
        %v1369 = vsel %vm1361, %v1346, %v1164
        %v1370 = vsel %vm1362, %v1346, %v1165
        %v1371 = vsel %vm1363, %v1346, %v1166
        %v1372 = vsel %vm1364, %v1346, %v1167
        %v1373 = vsel %vm1361, %v1347, %v1168
        %v1374 = vsel %vm1362, %v1347, %v1169
        %v1375 = vsel %vm1363, %v1347, %v1170
        %v1376 = vsel %vm1364, %v1347, %v1171
        %v1377 = vsel %vm1361, %v1348, %v1172
        %v1378 = vsel %vm1362, %v1348, %v1173
        %v1379 = vsel %vm1363, %v1348, %v1174
        %v1380 = vsel %vm1364, %v1348, %v1175
        %v1381 = vsel %vm1361, %v1349, %v1176
        %v1382 = vsel %vm1362, %v1349, %v1177
        %v1383 = vsel %vm1363, %v1349, %v1178
        %v1384 = vsel %vm1364, %v1349, %v1179
        %v1385 = vsel %vm1361, %v1350, %v1180
        %v1386 = vsel %vm1362, %v1350, %v1181
        %v1387 = vsel %vm1363, %v1350, %v1182
        %v1388 = vsel %vm1364, %v1350, %v1183
        %v1389 = vsel %vm1361, %v1351, %v1184
        %v1390 = vsel %vm1362, %v1351, %v1185
        %v1391 = vsel %vm1363, %v1351, %v1186
        %v1392 = vsel %vm1364, %v1351, %v1187
        %v1393 = vsel %vm1361, %v1352, %v1188
        %v1394 = vsel %vm1362, %v1352, %v1189
        %v1395 = vsel %vm1363, %v1352, %v1190
        %v1396 = vsel %vm1364, %v1352, %v1191
        %1397 = vmin.xlane.f32.xlu0 %v756
        %v1398 = vpop.xlane.xlu0 %1397
        %1399 = vmin.xlane.f32.xlu0 %v760
        %v1400 = vpop.xlane.xlu0 %1399
        %1401 = vmin.xlane.f32.xlu0 %v764
        %v1402 = vpop.xlane.xlu0 %1401
        %1403 = vmin.xlane.f32.xlu0 %v768
        %v1404 = vpop.xlane.xlu0 %1403
        %1405 = vmin.xlane.f32.xlu0 %v772
        %v1406 = vpop.xlane.xlu0 %1405
        %1407 = vmin.xlane.f32.xlu0 %v776
        %v1408 = vpop.xlane.xlu0 %1407
        %1409 = vmin.xlane.f32.xlu0 %v780
        %v1410 = vpop.xlane.xlu0 %1409
        %1411 = vmin.xlane.f32.xlu0 %v784
        %v1412 = vpop.xlane.xlu0 %1411
        %vm1413 = vcmp.le.f32.partialorder %v756, %v1398
        %vm1414 = vcmp.le.f32.partialorder %v760, %v1400
        %vm1415 = vcmp.le.f32.partialorder %v764, %v1402
        %vm1416 = vcmp.le.f32.partialorder %v768, %v1404
        %vm1417 = vcmp.le.f32.partialorder %v772, %v1406
        %vm1418 = vcmp.le.f32.partialorder %v776, %v1408
        %vm1419 = vcmp.le.f32.partialorder %v780, %v1410
        %vm1420 = vcmp.le.f32.partialorder %v784, %v1412
        %v1421 = vsel %vm1413, %v786, 128
        %v1422 = vsel %vm1414, %v786, 128
        %v1423 = vsel %vm1415, %v786, 128
        %v1424 = vsel %vm1416, %v786, 128
        %v1425 = vsel %vm1417, %v786, 128
        %v1426 = vsel %vm1418, %v786, 128
        %v1427 = vsel %vm1419, %v786, 128
        %v1428 = vsel %vm1420, %v786, 128
        %v1429 = vand.u32 %v1421, 65535
        %v1430 = vshra.s32 %v1421, 16
        %v1431 = vcvt.s32.f32 %v1429
        %v1432 = vcvt.s32.f32 %v1430
        %1433 = vmin.xlane.f32.xlu0 %v1432
        %v1434 = vpop.xlane.xlu0 %1433
        %vm1435 = vcmp.eq.f32.partialorder %v1432, %v1434
        %v1436 = vsel %vm1435, %v1431, inf
        %1437 = vmin.xlane.f32.xlu0 %v1436
        %v1438 = vpop.xlane.xlu0 %1437
        %v1439 = vcvt.f32.s32 %v1438
        %v1440 = vcvt.f32.s32 %v1434
        %v1441 = vshll.u32 %v1440, 16
        %v1442 = vadd.s32 %v1441, %v1439
        %v1443 = vand.u32 %v1422, 65535
        %v1444 = vshra.s32 %v1422, 16
        %v1445 = vcvt.s32.f32 %v1443
        %v1446 = vcvt.s32.f32 %v1444
        %1447 = vmin.xlane.f32.xlu0 %v1446
        %v1448 = vpop.xlane.xlu0 %1447
        %vm1449 = vcmp.eq.f32.partialorder %v1446, %v1448
        %v1450 = vsel %vm1449, %v1445, inf
        %1451 = vmin.xlane.f32.xlu0 %v1450
        %v1452 = vpop.xlane.xlu0 %1451
        %v1453 = vcvt.f32.s32 %v1452
        %v1454 = vcvt.f32.s32 %v1448
        %v1455 = vshll.u32 %v1454, 16
        %v1456 = vadd.s32 %v1455, %v1453
        %v1457 = vand.u32 %v1423, 65535
        %v1458 = vshra.s32 %v1423, 16
        %v1459 = vcvt.s32.f32 %v1457
        %v1460 = vcvt.s32.f32 %v1458
        %1461 = vmin.xlane.f32.xlu0 %v1460
        %v1462 = vpop.xlane.xlu0 %1461
        %vm1463 = vcmp.eq.f32.partialorder %v1460, %v1462
        %v1464 = vsel %vm1463, %v1459, inf
        %1465 = vmin.xlane.f32.xlu0 %v1464
        %v1466 = vpop.xlane.xlu0 %1465
        %v1467 = vcvt.f32.s32 %v1466
        %v1468 = vcvt.f32.s32 %v1462
        %v1469 = vshll.u32 %v1468, 16
        %v1470 = vadd.s32 %v1469, %v1467
        %v1471 = vand.u32 %v1424, 65535
        %v1472 = vshra.s32 %v1424, 16
        %v1473 = vcvt.s32.f32 %v1471
        %v1474 = vcvt.s32.f32 %v1472
        %1475 = vmin.xlane.f32.xlu0 %v1474
        %v1476 = vpop.xlane.xlu0 %1475
        %vm1477 = vcmp.eq.f32.partialorder %v1474, %v1476
        %v1478 = vsel %vm1477, %v1473, inf
        %1479 = vmin.xlane.f32.xlu0 %v1478
        %v1480 = vpop.xlane.xlu0 %1479
        %v1481 = vcvt.f32.s32 %v1480
        %v1482 = vcvt.f32.s32 %v1476
        %v1483 = vshll.u32 %v1482, 16
        %v1484 = vadd.s32 %v1483, %v1481
        %v1485 = vand.u32 %v1425, 65535
        %v1486 = vshra.s32 %v1425, 16
        %v1487 = vcvt.s32.f32 %v1485
        %v1488 = vcvt.s32.f32 %v1486
        %1489 = vmin.xlane.f32.xlu0 %v1488
        %v1490 = vpop.xlane.xlu0 %1489
        %vm1491 = vcmp.eq.f32.partialorder %v1488, %v1490
        %v1492 = vsel %vm1491, %v1487, inf
        %1493 = vmin.xlane.f32.xlu0 %v1492
        %v1494 = vpop.xlane.xlu0 %1493
        %v1495 = vcvt.f32.s32 %v1494
        %v1496 = vcvt.f32.s32 %v1490
        %v1497 = vshll.u32 %v1496, 16
        %v1498 = vadd.s32 %v1497, %v1495
        %v1499 = vand.u32 %v1426, 65535
        %v1500 = vshra.s32 %v1426, 16
        %v1501 = vcvt.s32.f32 %v1499
        %v1502 = vcvt.s32.f32 %v1500
        %1503 = vmin.xlane.f32.xlu0 %v1502
        %v1504 = vpop.xlane.xlu0 %1503
        %vm1505 = vcmp.eq.f32.partialorder %v1502, %v1504
        %v1506 = vsel %vm1505, %v1501, inf
        %1507 = vmin.xlane.f32.xlu0 %v1506
        %v1508 = vpop.xlane.xlu0 %1507
        %v1509 = vcvt.f32.s32 %v1508
        %v1510 = vcvt.f32.s32 %v1504
        %v1511 = vshll.u32 %v1510, 16
        %v1512 = vadd.s32 %v1511, %v1509
        %v1513 = vand.u32 %v1427, 65535
        %v1514 = vshra.s32 %v1427, 16
        %v1515 = vcvt.s32.f32 %v1513
        %v1516 = vcvt.s32.f32 %v1514
        %1517 = vmin.xlane.f32.xlu0 %v1516
        %v1518 = vpop.xlane.xlu0 %1517
        %vm1519 = vcmp.eq.f32.partialorder %v1516, %v1518
        %v1520 = vsel %vm1519, %v1515, inf
        %1521 = vmin.xlane.f32.xlu0 %v1520
        %v1522 = vpop.xlane.xlu0 %1521
        %v1523 = vcvt.f32.s32 %v1522
        %v1524 = vcvt.f32.s32 %v1518
        %v1525 = vshll.u32 %v1524, 16
        %v1526 = vadd.s32 %v1525, %v1523
        %v1527 = vand.u32 %v1428, 65535
        %v1528 = vshra.s32 %v1428, 16
        %v1529 = vcvt.s32.f32 %v1527
        %v1530 = vcvt.s32.f32 %v1528
        %1531 = vmin.xlane.f32.xlu0 %v1530
        %v1532 = vpop.xlane.xlu0 %1531
        %vm1533 = vcmp.eq.f32.partialorder %v1530, %v1532
        %v1534 = vsel %vm1533, %v1529, inf
        %1535 = vmin.xlane.f32.xlu0 %v1534
        %v1536 = vpop.xlane.xlu0 %1535
        %v1537 = vcvt.f32.s32 %v1536
        %v1538 = vcvt.f32.s32 %v1532
        %v1539 = vshll.u32 %v1538, 16
        %v1540 = vadd.s32 %v1539, %v1537
        %vm1541 = vcmp.eq.s32.totalorder %v786, 3
        %v1542 = vsel %vm1541, %v1442, %v1337
        %v1543 = vsel %vm1541, %v1456, %v1338
        %v1544 = vsel %vm1541, %v1470, %v1339
        %v1545 = vsel %vm1541, %v1484, %v1340
        %v1546 = vsel %vm1541, %v1498, %v1341
        %v1547 = vsel %vm1541, %v1512, %v1342
        %v1548 = vsel %vm1541, %v1526, %v1343
        %v1549 = vsel %vm1541, %v1540, %v1344
        %v1550 = vadd.s32 %v1442, 384
        %v1551 = vadd.s32 %v1456, 384
        %v1552 = vadd.s32 %v1470, 384
        %v1553 = vadd.s32 %v1484, 384
        %v1554 = vadd.s32 %v1498, 384
        %v1555 = vadd.s32 %v1512, 384
        %v1556 = vadd.s32 %v1526, 384
        %v1557 = vadd.s32 %v1540, 384
        %vm1558 = vcmp.ge.s32.totalorder %v786, 384
        %vm1559 = vcmp.ge.s32.totalorder %v787, 384
        %vm1560 = vcmp.ge.s32.totalorder %v788, 384
        %vm1561 = vcmp.ge.s32.totalorder %v789, 384
        %vm1562 = vcmp.lt.s32.totalorder %v786, 512
        %vm1563 = vcmp.lt.s32.totalorder %v787, 512
        %vm1564 = vcmp.lt.s32.totalorder %v788, 512
        %vm1565 = vcmp.lt.s32.totalorder %v789, 512
        %vm1566 = vmand %vm1558, %vm1562
        %vm1567 = vmand %vm1559, %vm1563
        %vm1568 = vmand %vm1560, %vm1564
        %vm1569 = vmand %vm1561, %vm1565
        %v1570 = vsel %vm1566, %v1550, %v1365
        %v1571 = vsel %vm1567, %v1550, %v1366
        %v1572 = vsel %vm1568, %v1550, %v1367
        %v1573 = vsel %vm1569, %v1550, %v1368
        %v1574 = vsel %vm1566, %v1551, %v1369
        %v1575 = vsel %vm1567, %v1551, %v1370
        %v1576 = vsel %vm1568, %v1551, %v1371
        %v1577 = vsel %vm1569, %v1551, %v1372
        %v1578 = vsel %vm1566, %v1552, %v1373
        %v1579 = vsel %vm1567, %v1552, %v1374
        %v1580 = vsel %vm1568, %v1552, %v1375
        %v1581 = vsel %vm1569, %v1552, %v1376
        %v1582 = vsel %vm1566, %v1553, %v1377
        %v1583 = vsel %vm1567, %v1553, %v1378
        %v1584 = vsel %vm1568, %v1553, %v1379
        %v1585 = vsel %vm1569, %v1553, %v1380
        %v1586 = vsel %vm1566, %v1554, %v1381
        %v1587 = vsel %vm1567, %v1554, %v1382
        %v1588 = vsel %vm1568, %v1554, %v1383
        %v1589 = vsel %vm1569, %v1554, %v1384
        %v1590 = vsel %vm1566, %v1555, %v1385
        %v1591 = vsel %vm1567, %v1555, %v1386
        %v1592 = vsel %vm1568, %v1555, %v1387
        %v1593 = vsel %vm1569, %v1555, %v1388
        %v1594 = vsel %vm1566, %v1556, %v1389
        %v1595 = vsel %vm1567, %v1556, %v1390
        %v1596 = vsel %vm1568, %v1556, %v1391
        %v1597 = vsel %vm1569, %v1556, %v1392
        %v1598 = vsel %vm1566, %v1557, %v1393
        %v1599 = vsel %vm1567, %v1557, %v1394
        %v1600 = vsel %vm1568, %v1557, %v1395
        %v1601 = vsel %vm1569, %v1557, %v1396
        %vm1602 = vcmp.eq.s32.totalorder %v786, %v1570
        %vm1603 = vcmp.eq.s32.totalorder %v787, %v1571
        %vm1604 = vcmp.eq.s32.totalorder %v788, %v1572
        %vm1605 = vcmp.eq.s32.totalorder %v789, %v1573
        %vm1606 = vcmp.eq.s32.totalorder %v786, %v1574
        %vm1607 = vcmp.eq.s32.totalorder %v787, %v1575
        %vm1608 = vcmp.eq.s32.totalorder %v788, %v1576
        %vm1609 = vcmp.eq.s32.totalorder %v789, %v1577
        %vm1610 = vcmp.eq.s32.totalorder %v786, %v1578
        %vm1611 = vcmp.eq.s32.totalorder %v787, %v1579
        %vm1612 = vcmp.eq.s32.totalorder %v788, %v1580
        %vm1613 = vcmp.eq.s32.totalorder %v789, %v1581
        %vm1614 = vcmp.eq.s32.totalorder %v786, %v1582
        %vm1615 = vcmp.eq.s32.totalorder %v787, %v1583
        %vm1616 = vcmp.eq.s32.totalorder %v788, %v1584
        %vm1617 = vcmp.eq.s32.totalorder %v789, %v1585
        %vm1618 = vcmp.eq.s32.totalorder %v786, %v1586
        %vm1619 = vcmp.eq.s32.totalorder %v787, %v1587
        %vm1620 = vcmp.eq.s32.totalorder %v788, %v1588
        %vm1621 = vcmp.eq.s32.totalorder %v789, %v1589
        %vm1622 = vcmp.eq.s32.totalorder %v786, %v1590
        %vm1623 = vcmp.eq.s32.totalorder %v787, %v1591
        %vm1624 = vcmp.eq.s32.totalorder %v788, %v1592
        %vm1625 = vcmp.eq.s32.totalorder %v789, %v1593
        %vm1626 = vcmp.eq.s32.totalorder %v786, %v1594
        %vm1627 = vcmp.eq.s32.totalorder %v787, %v1595
        %vm1628 = vcmp.eq.s32.totalorder %v788, %v1596
        %vm1629 = vcmp.eq.s32.totalorder %v789, %v1597
        %vm1630 = vcmp.eq.s32.totalorder %v786, %v1598
        %vm1631 = vcmp.eq.s32.totalorder %v787, %v1599
        %vm1632 = vcmp.eq.s32.totalorder %v788, %v1600
        %vm1633 = vcmp.eq.s32.totalorder %v789, %v1601
        %v1634 = vsel %vm1602, 1, 0
        %v1635 = vsel %vm1603, 1, 0
        %v1636 = vsel %vm1604, 1, 0
        %v1637 = vsel %vm1605, 1, 0
        %v1638 = vsel %vm1606, 1, 0
        %v1639 = vsel %vm1607, 1, 0
        %v1640 = vsel %vm1608, 1, 0
        %v1641 = vsel %vm1609, 1, 0
        %v1642 = vsel %vm1610, 1, 0
        %v1643 = vsel %vm1611, 1, 0
        %v1644 = vsel %vm1612, 1, 0
        %v1645 = vsel %vm1613, 1, 0
        %v1646 = vsel %vm1614, 1, 0
        %v1647 = vsel %vm1615, 1, 0
        %v1648 = vsel %vm1616, 1, 0
        %v1649 = vsel %vm1617, 1, 0
        %v1650 = vsel %vm1618, 1, 0
        %v1651 = vsel %vm1619, 1, 0
        %v1652 = vsel %vm1620, 1, 0
        %v1653 = vsel %vm1621, 1, 0
        %v1654 = vsel %vm1622, 1, 0
        %v1655 = vsel %vm1623, 1, 0
        %v1656 = vsel %vm1624, 1, 0
        %v1657 = vsel %vm1625, 1, 0
        %v1658 = vsel %vm1626, 1, 0
        %v1659 = vsel %vm1627, 1, 0
        %v1660 = vsel %vm1628, 1, 0
        %v1661 = vsel %vm1629, 1, 0
        %v1662 = vsel %vm1630, 1, 0
        %v1663 = vsel %vm1631, 1, 0
        %v1664 = vsel %vm1632, 1, 0
        %v1665 = vsel %vm1633, 1, 0
        %v1666 = vcvt.s32.f32 %v1634
        %v1667 = vcvt.s32.f32 %v1635
        %v1668 = vcvt.s32.f32 %v1636
        %v1669 = vcvt.s32.f32 %v1637
        %v1670 = vcvt.s32.f32 %v1638
        %v1671 = vcvt.s32.f32 %v1639
        %v1672 = vcvt.s32.f32 %v1640
        %v1673 = vcvt.s32.f32 %v1641
        %v1674 = vcvt.s32.f32 %v1642
        %v1675 = vcvt.s32.f32 %v1643
        %v1676 = vcvt.s32.f32 %v1644
        %v1677 = vcvt.s32.f32 %v1645
        %v1678 = vcvt.s32.f32 %v1646
        %v1679 = vcvt.s32.f32 %v1647
        %v1680 = vcvt.s32.f32 %v1648
        %v1681 = vcvt.s32.f32 %v1649
        %v1682 = vcvt.s32.f32 %v1650
        %v1683 = vcvt.s32.f32 %v1651
        %v1684 = vcvt.s32.f32 %v1652
        %v1685 = vcvt.s32.f32 %v1653
        %v1686 = vcvt.s32.f32 %v1654
        %v1687 = vcvt.s32.f32 %v1655
        %v1688 = vcvt.s32.f32 %v1656
        %v1689 = vcvt.s32.f32 %v1657
        %v1690 = vcvt.s32.f32 %v1658
        %v1691 = vcvt.s32.f32 %v1659
        %v1692 = vcvt.s32.f32 %v1660
        %v1693 = vcvt.s32.f32 %v1661
        %v1694 = vcvt.s32.f32 %v1662
        %v1695 = vcvt.s32.f32 %v1663
        %v1696 = vcvt.s32.f32 %v1664
        %v1697 = vcvt.s32.f32 %v1665
        %v1698 = vpack.c.bf16 %v1670, %v1666
        %v1699 = vpack.c.bf16 %v1671, %v1667
        %v1700 = vpack.c.bf16 %v1672, %v1668
        %v1701 = vpack.c.bf16 %v1673, %v1669
        %v1702 = vpack.c.bf16 %v1678, %v1674
        %v1703 = vpack.c.bf16 %v1679, %v1675
        %v1704 = vpack.c.bf16 %v1680, %v1676
        %v1705 = vpack.c.bf16 %v1681, %v1677
        %v1706 = vpack.c.bf16 %v1686, %v1682
        %v1707 = vpack.c.bf16 %v1687, %v1683
        %v1708 = vpack.c.bf16 %v1688, %v1684
        %v1709 = vpack.c.bf16 %v1689, %v1685
        %v1710 = vpack.c.bf16 %v1694, %v1690
        %v1711 = vpack.c.bf16 %v1695, %v1691
        %v1712 = vpack.c.bf16 %v1696, %v1692
        %v1713 = vpack.c.bf16 %v1697, %v1693
        %v1714 = vld [vmem:[#allocation8] sm:$0xf]
        %v1715 = vld [vmem:[#allocation8 + $0x4] sm:$0xf]
        %v1716 = vld [vmem:[#allocation8 + $0x8] sm:$0xf]
        %v1717 = vld [vmem:[#allocation8 + $0xc] sm:$0xf]
        %v1718 = vld [vmem:[#allocation8 + $0x10] sm:$0xf]
        %v1719 = vld [vmem:[#allocation8 + $0x14] sm:$0xf]
        %v1720 = vld [vmem:[#allocation8 + $0x18] sm:$0xf]
        %v1721 = vld [vmem:[#allocation8 + $0x1c] sm:$0xf]
        %v1722 = vld [vmem:[#allocation8 + $0x20] sm:$0xf]
        %v1723 = vld [vmem:[#allocation8 + $0x24] sm:$0xf]
        %v1724 = vld [vmem:[#allocation8 + $0x28] sm:$0xf]
        %v1725 = vld [vmem:[#allocation8 + $0x2c] sm:$0xf]
        %v1726 = vld [vmem:[#allocation8 + $0x30] sm:$0xf]
        %v1727 = vld [vmem:[#allocation8 + $0x34] sm:$0xf]
        %v1728 = vld [vmem:[#allocation8 + $0x38] sm:$0xf]
        %v1729 = vld [vmem:[#allocation8 + $0x3c] sm:$0xf]
        %v1730 = vld [vmem:[#allocation8 + $0x40] sm:$0xf]
        %v1731 = vld [vmem:[#allocation8 + $0x44] sm:$0xf]
        %v1732 = vld [vmem:[#allocation8 + $0x48] sm:$0xf]
        %v1733 = vld [vmem:[#allocation8 + $0x4c] sm:$0xf]
        %v1734 = vld [vmem:[#allocation8 + $0x50] sm:$0xf]
        %v1735 = vld [vmem:[#allocation8 + $0x54] sm:$0xf]
        %v1736 = vld [vmem:[#allocation8 + $0x58] sm:$0xf]
        %v1737 = vld [vmem:[#allocation8 + $0x5c] sm:$0xf]
        %v1738 = vld [vmem:[#allocation8 + $0x60] sm:$0xf]
        %v1739 = vld [vmem:[#allocation8 + $0x64] sm:$0xf]
        %v1740 = vld [vmem:[#allocation8 + $0x68] sm:$0xf]
        %v1741 = vld [vmem:[#allocation8 + $0x6c] sm:$0xf]
        %v1742 = vld [vmem:[#allocation8 + $0x70] sm:$0xf]
        %v1743 = vld [vmem:[#allocation8 + $0x74] sm:$0xf]
        %v1744 = vld [vmem:[#allocation8 + $0x78] sm:$0xf]
        %v1745 = vld [vmem:[#allocation8 + $0x7c] sm:$0xf]
        %v1746 = vld [vmem:[#allocation8 + $0x80] sm:$0xf]
        %v1747 = vld [vmem:[#allocation8 + $0x84] sm:$0xf]
        %v1748 = vld [vmem:[#allocation8 + $0x88] sm:$0xf]
        %v1749 = vld [vmem:[#allocation8 + $0x8c] sm:$0xf]
        %v1750 = vld [vmem:[#allocation8 + $0x90] sm:$0xf]
        %v1751 = vld [vmem:[#allocation8 + $0x94] sm:$0xf]
        %v1752 = vld [vmem:[#allocation8 + $0x98] sm:$0xf]
        %v1753 = vld [vmem:[#allocation8 + $0x9c] sm:$0xf]
        %v1754 = vld [vmem:[#allocation8 + $0xa0] sm:$0xf]
        %v1755 = vld [vmem:[#allocation8 + $0xa4] sm:$0xf]
        %v1756 = vld [vmem:[#allocation8 + $0xa8] sm:$0xf]
        %v1757 = vld [vmem:[#allocation8 + $0xac] sm:$0xf]
        %v1758 = vld [vmem:[#allocation8 + $0xb0] sm:$0xf]
        %v1759 = vld [vmem:[#allocation8 + $0xb4] sm:$0xf]
        %v1760 = vld [vmem:[#allocation8 + $0xb8] sm:$0xf]
        %v1761 = vld [vmem:[#allocation8 + $0xbc] sm:$0xf]
        %v1762 = vld [vmem:[#allocation8 + $0xc0] sm:$0xf]
        %v1763 = vld [vmem:[#allocation8 + $0xc4] sm:$0xf]
        %v1764 = vld [vmem:[#allocation8 + $0xc8] sm:$0xf]
        %v1765 = vld [vmem:[#allocation8 + $0xcc] sm:$0xf]
        %v1766 = vld [vmem:[#allocation8 + $0xd0] sm:$0xf]
        %v1767 = vld [vmem:[#allocation8 + $0xd4] sm:$0xf]
        %v1768 = vld [vmem:[#allocation8 + $0xd8] sm:$0xf]
        %v1769 = vld [vmem:[#allocation8 + $0xdc] sm:$0xf]
        %v1770 = vld [vmem:[#allocation8 + $0xe0] sm:$0xf]
        %v1771 = vld [vmem:[#allocation8 + $0xe4] sm:$0xf]
        %v1772 = vld [vmem:[#allocation8 + $0xe8] sm:$0xf]
        %v1773 = vld [vmem:[#allocation8 + $0xec] sm:$0xf]
        %v1774 = vld [vmem:[#allocation8 + $0xf0] sm:$0xf]
        %v1775 = vld [vmem:[#allocation8 + $0xf4] sm:$0xf]
        %v1776 = vld [vmem:[#allocation8 + $0xf8] sm:$0xf]
        %v1777 = vld [vmem:[#allocation8 + $0xfc] sm:$0xf]
        %v1778 = vld [vmem:[#allocation10] sm:$0xf]
        %v1779 = vld [vmem:[#allocation10 + $0x4] sm:$0xf]
        %v1780 = vld [vmem:[#allocation10 + $0x8] sm:$0xf]
        %v1781 = vld [vmem:[#allocation10 + $0xc] sm:$0xf]
        %v1782 = vld [vmem:[#allocation10 + $0x10] sm:$0xf]
        %v1783 = vld [vmem:[#allocation10 + $0x14] sm:$0xf]
        %v1784 = vld [vmem:[#allocation10 + $0x18] sm:$0xf]
        %v1785 = vld [vmem:[#allocation10 + $0x1c] sm:$0xf]
        %v1786 = vld [vmem:[#allocation10 + $0x20] sm:$0xf]
        %v1787 = vld [vmem:[#allocation10 + $0x24] sm:$0xf]
        %v1788 = vld [vmem:[#allocation10 + $0x28] sm:$0xf]
        %v1789 = vld [vmem:[#allocation10 + $0x2c] sm:$0xf]
        %v1790 = vld [vmem:[#allocation10 + $0x30] sm:$0xf]
        %v1791 = vld [vmem:[#allocation10 + $0x34] sm:$0xf]
        %v1792 = vld [vmem:[#allocation10 + $0x38] sm:$0xf]
        %v1793 = vld [vmem:[#allocation10 + $0x3c] sm:$0xf]
        %v1794 = vld [vmem:[#allocation10 + $0x40] sm:$0xf]
        %v1795 = vld [vmem:[#allocation10 + $0x44] sm:$0xf]
        %v1796 = vld [vmem:[#allocation10 + $0x48] sm:$0xf]
        %v1797 = vld [vmem:[#allocation10 + $0x4c] sm:$0xf]
        %v1798 = vld [vmem:[#allocation10 + $0x50] sm:$0xf]
        %v1799 = vld [vmem:[#allocation10 + $0x54] sm:$0xf]
        %v1800 = vld [vmem:[#allocation10 + $0x58] sm:$0xf]
        %v1801 = vld [vmem:[#allocation10 + $0x5c] sm:$0xf]
        %v1802 = vld [vmem:[#allocation10 + $0x60] sm:$0xf]
        %v1803 = vld [vmem:[#allocation10 + $0x64] sm:$0xf]
        %v1804 = vld [vmem:[#allocation10 + $0x68] sm:$0xf]
        %v1805 = vld [vmem:[#allocation10 + $0x6c] sm:$0xf]
        %v1806 = vld [vmem:[#allocation10 + $0x70] sm:$0xf]
        %v1807 = vld [vmem:[#allocation10 + $0x74] sm:$0xf]
        %v1808 = vld [vmem:[#allocation10 + $0x78] sm:$0xf]
        %v1809 = vld [vmem:[#allocation10 + $0x7c] sm:$0xf]
        %v1810 = vld [vmem:[#allocation10 + $0x80] sm:$0xf]
        %v1811 = vld [vmem:[#allocation10 + $0x84] sm:$0xf]
        %v1812 = vld [vmem:[#allocation10 + $0x88] sm:$0xf]
        %v1813 = vld [vmem:[#allocation10 + $0x8c] sm:$0xf]
        %v1814 = vld [vmem:[#allocation10 + $0x90] sm:$0xf]
        %v1815 = vld [vmem:[#allocation10 + $0x94] sm:$0xf]
        %v1816 = vld [vmem:[#allocation10 + $0x98] sm:$0xf]
        %v1817 = vld [vmem:[#allocation10 + $0x9c] sm:$0xf]
        %v1818 = vld [vmem:[#allocation10 + $0xa0] sm:$0xf]
        %v1819 = vld [vmem:[#allocation10 + $0xa4] sm:$0xf]
        %v1820 = vld [vmem:[#allocation10 + $0xa8] sm:$0xf]
        %v1821 = vld [vmem:[#allocation10 + $0xac] sm:$0xf]
        %v1822 = vld [vmem:[#allocation10 + $0xb0] sm:$0xf]
        %v1823 = vld [vmem:[#allocation10 + $0xb4] sm:$0xf]
        %v1824 = vld [vmem:[#allocation10 + $0xb8] sm:$0xf]
        %v1825 = vld [vmem:[#allocation10 + $0xbc] sm:$0xf]
        %v1826 = vld [vmem:[#allocation10 + $0xc0] sm:$0xf]
        %v1827 = vld [vmem:[#allocation10 + $0xc4] sm:$0xf]
        %v1828 = vld [vmem:[#allocation10 + $0xc8] sm:$0xf]
        %v1829 = vld [vmem:[#allocation10 + $0xcc] sm:$0xf]
        %v1830 = vld [vmem:[#allocation10 + $0xd0] sm:$0xf]
        %v1831 = vld [vmem:[#allocation10 + $0xd4] sm:$0xf]
        %v1832 = vld [vmem:[#allocation10 + $0xd8] sm:$0xf]
        %v1833 = vld [vmem:[#allocation10 + $0xdc] sm:$0xf]
        %v1834 = vld [vmem:[#allocation10 + $0xe0] sm:$0xf]
        %v1835 = vld [vmem:[#allocation10 + $0xe4] sm:$0xf]
        %v1836 = vld [vmem:[#allocation10 + $0xe8] sm:$0xf]
        %v1837 = vld [vmem:[#allocation10 + $0xec] sm:$0xf]
        %v1838 = vld [vmem:[#allocation10 + $0xf0] sm:$0xf]
        %v1839 = vld [vmem:[#allocation10 + $0xf4] sm:$0xf]
        %v1840 = vld [vmem:[#allocation10 + $0xf8] sm:$0xf]
        %v1841 = vld [vmem:[#allocation10 + $0xfc] sm:$0xf]
        %v1906 = vunpack.c.l.b16 %v1778
        %v1907 = vunpack.c.l.b16 %v1779
        %v1908 = vunpack.c.l.b16 %v1780
        %v1909 = vunpack.c.l.b16 %v1781
        %v1910 = vunpack.c.l.b16 %v1782
        %v1911 = vunpack.c.l.b16 %v1783
        %v1912 = vunpack.c.l.b16 %v1784
        %v1913 = vunpack.c.l.b16 %v1785
        %v1914 = vunpack.c.l.b16 %v1786
        %v1915 = vunpack.c.l.b16 %v1787
        %v1916 = vunpack.c.l.b16 %v1788
        %v1917 = vunpack.c.l.b16 %v1789
        %v1918 = vunpack.c.l.b16 %v1790
        %v1919 = vunpack.c.l.b16 %v1791
        %v1920 = vunpack.c.l.b16 %v1792
        %v1921 = vunpack.c.l.b16 %v1793
        %v1922 = vunpack.c.l.b16 %v1794
        %v1923 = vunpack.c.l.b16 %v1795
        %v1924 = vunpack.c.l.b16 %v1796
        %v1925 = vunpack.c.l.b16 %v1797
        %v1926 = vunpack.c.l.b16 %v1798
        %v1927 = vunpack.c.l.b16 %v1799
        %v1928 = vunpack.c.l.b16 %v1800
        %v1929 = vunpack.c.l.b16 %v1801
        %v1930 = vunpack.c.l.b16 %v1802
        %v1931 = vunpack.c.l.b16 %v1803
        %v1932 = vunpack.c.l.b16 %v1804
        %v1933 = vunpack.c.l.b16 %v1805
        %v1934 = vunpack.c.l.b16 %v1806
        %v1935 = vunpack.c.l.b16 %v1807
        %v1936 = vunpack.c.l.b16 %v1808
        %v1937 = vunpack.c.l.b16 %v1809
        %v1938 = vunpack.c.l.b16 %v1810
        %v1939 = vunpack.c.l.b16 %v1811
        %v1940 = vunpack.c.l.b16 %v1812
        %v1941 = vunpack.c.l.b16 %v1813
        %v1942 = vunpack.c.l.b16 %v1814
        %v1943 = vunpack.c.l.b16 %v1815
        %v1944 = vunpack.c.l.b16 %v1816
        %v1945 = vunpack.c.l.b16 %v1817
        %v1946 = vunpack.c.l.b16 %v1818
        %v1947 = vunpack.c.l.b16 %v1819
        %v1948 = vunpack.c.l.b16 %v1820
        %v1949 = vunpack.c.l.b16 %v1821
        %v1950 = vunpack.c.l.b16 %v1822
        %v1951 = vunpack.c.l.b16 %v1823
        %v1952 = vunpack.c.l.b16 %v1824
        %v1953 = vunpack.c.l.b16 %v1825
        %v1954 = vunpack.c.l.b16 %v1826
        %v1955 = vunpack.c.l.b16 %v1827
        %v1956 = vunpack.c.l.b16 %v1828
        %v1957 = vunpack.c.l.b16 %v1829
        %v1958 = vunpack.c.l.b16 %v1830
        %v1959 = vunpack.c.l.b16 %v1831
        %v1960 = vunpack.c.l.b16 %v1832
        %v1961 = vunpack.c.l.b16 %v1833
        %v1962 = vunpack.c.l.b16 %v1834
        %v1963 = vunpack.c.l.b16 %v1835
        %v1964 = vunpack.c.l.b16 %v1836
        %v1965 = vunpack.c.l.b16 %v1837
        %v1966 = vunpack.c.l.b16 %v1838
        %v1967 = vunpack.c.l.b16 %v1839
        %v1968 = vunpack.c.l.b16 %v1840
        %v1969 = vunpack.c.l.b16 %v1841
        %v1970 = vpack.c.b16 %v1907, %v1906
        %v1971 = vpack.c.b16 %v1909, %v1908
        %v1972 = vpack.c.b16 %v1911, %v1910
        %v1973 = vpack.c.b16 %v1913, %v1912
        %v1974 = vpack.c.b16 %v1915, %v1914
        %v1975 = vpack.c.b16 %v1917, %v1916
        %v1976 = vpack.c.b16 %v1919, %v1918
        %v1977 = vpack.c.b16 %v1921, %v1920
        %v1978 = vpack.c.b16 %v1923, %v1922
        %v1979 = vpack.c.b16 %v1925, %v1924
        %v1980 = vpack.c.b16 %v1927, %v1926
        %v1981 = vpack.c.b16 %v1929, %v1928
        %v1982 = vpack.c.b16 %v1931, %v1930
        %v1983 = vpack.c.b16 %v1933, %v1932
        %v1984 = vpack.c.b16 %v1935, %v1934
        %v1985 = vpack.c.b16 %v1937, %v1936
        %v1986 = vpack.c.b16 %v1939, %v1938
        %v1987 = vpack.c.b16 %v1941, %v1940
        %v1988 = vpack.c.b16 %v1943, %v1942
        %v1989 = vpack.c.b16 %v1945, %v1944
        %v1990 = vpack.c.b16 %v1947, %v1946
        %v1991 = vpack.c.b16 %v1949, %v1948
        %v1992 = vpack.c.b16 %v1951, %v1950
        %v1993 = vpack.c.b16 %v1953, %v1952
        %v1994 = vpack.c.b16 %v1955, %v1954
        %v1995 = vpack.c.b16 %v1957, %v1956
        %v1996 = vpack.c.b16 %v1959, %v1958
        %v1997 = vpack.c.b16 %v1961, %v1960
        %v1998 = vpack.c.b16 %v1963, %v1962
        %v1999 = vpack.c.b16 %v1965, %v1964
        %v2000 = vpack.c.b16 %v1967, %v1966
        %v2001 = vpack.c.b16 %v1969, %v1968
        %2034 = vmatpush.bf16.msra.mxu0 %v1977
        %2035 = vmatpush.bf16.msra.mxu0 %v1976
        %2036 = vmatpush.bf16.msra.mxu0 %v1975
        %2037 = vmatpush.bf16.msra.mxu0 %v1974
        %2038 = vmatpush.bf16.msra.mxu0 %v1973
        %2039 = vmatpush.bf16.msra.mxu0 %v1972
        %2040 = vmatpush.bf16.msra.mxu0 %v1971
        %2041 = vmatpush.bf16.msra.mxu0 %v1970
        %2042 = vmatmul.bf16.gmra.mxu0 %v1698
        %v2043 = vpop.f32.mrf.mxu0
        %v2044 = vadd.f32 0.0, %v2043
        %v2045 = vpop.f32.mrf.mxu0
        %v2046 = vadd.f32 0.0, %v2045
        %2047 = vmatmul.bf16.gmra.mxu0 %v1702
        %v2048 = vpop.f32.mrf.mxu0
        %v2049 = vadd.f32 0.0, %v2048
        %v2050 = vpop.f32.mrf.mxu0
        %v2051 = vadd.f32 0.0, %v2050
        %2052 = vmatmul.bf16.gmra.mxu0 %v1706
        %v2053 = vpop.f32.mrf.mxu0
        %v2054 = vadd.f32 0.0, %v2053
        %v2055 = vpop.f32.mrf.mxu0
        %v2056 = vadd.f32 0.0, %v2055
        %2057 = vmatmul.bf16.gmra.mxu0 %v1710
        %v2058 = vpop.f32.mrf.mxu0
        %v2059 = vadd.f32 0.0, %v2058
        %v2060 = vpop.f32.mrf.mxu0
        %v2061 = vadd.f32 0.0, %v2060
        %2062 = vdwg.mxu0
        %2063 = vmatpush.bf16.msra.mxu0 %v1985
        %2064 = vmatpush.bf16.msra.mxu0 %v1984
        %2065 = vmatpush.bf16.msra.mxu0 %v1983
        %2066 = vmatpush.bf16.msra.mxu0 %v1982
        %2067 = vmatpush.bf16.msra.mxu0 %v1981
        %2068 = vmatpush.bf16.msra.mxu0 %v1980
        %2069 = vmatpush.bf16.msra.mxu0 %v1979
        %2070 = vmatpush.bf16.msra.mxu0 %v1978
        %2071 = vmatmul.bf16.gmra.mxu0 %v1699
        %v2072 = vpop.f32.mrf.mxu0
        %v2073 = vadd.f32 %v2044, %v2072
        %v2074 = vpop.f32.mrf.mxu0
        %v2075 = vadd.f32 %v2046, %v2074
        %2076 = vmatmul.bf16.gmra.mxu0 %v1703
        %v2077 = vpop.f32.mrf.mxu0
        %v2078 = vadd.f32 %v2049, %v2077
        %v2079 = vpop.f32.mrf.mxu0
        %v2080 = vadd.f32 %v2051, %v2079
        %2081 = vmatmul.bf16.gmra.mxu0 %v1707
        %v2082 = vpop.f32.mrf.mxu0
        %v2083 = vadd.f32 %v2054, %v2082
        %v2084 = vpop.f32.mrf.mxu0
        %v2085 = vadd.f32 %v2056, %v2084
        %2086 = vmatmul.bf16.gmra.mxu0 %v1711
        %v2087 = vpop.f32.mrf.mxu0
        %v2088 = vadd.f32 %v2059, %v2087
        %v2089 = vpop.f32.mrf.mxu0
        %v2090 = vadd.f32 %v2061, %v2089
        %2091 = vdwg.mxu0
        %2092 = vmatpush.bf16.msra.mxu0 %v1993
        %2093 = vmatpush.bf16.msra.mxu0 %v1992
        %2094 = vmatpush.bf16.msra.mxu0 %v1991
        %2095 = vmatpush.bf16.msra.mxu0 %v1990
        %2096 = vmatpush.bf16.msra.mxu0 %v1989
        %2097 = vmatpush.bf16.msra.mxu0 %v1988
        %2098 = vmatpush.bf16.msra.mxu0 %v1987
        %2099 = vmatpush.bf16.msra.mxu0 %v1986
        %2100 = vmatmul.bf16.gmra.mxu0 %v1700
        %v2101 = vpop.f32.mrf.mxu0
        %v2102 = vadd.f32 %v2073, %v2101
        %v2103 = vpop.f32.mrf.mxu0
        %v2104 = vadd.f32 %v2075, %v2103
        %2105 = vmatmul.bf16.gmra.mxu0 %v1704
        %v2106 = vpop.f32.mrf.mxu0
        %v2107 = vadd.f32 %v2078, %v2106
        %v2108 = vpop.f32.mrf.mxu0
        %v2109 = vadd.f32 %v2080, %v2108
        %2110 = vmatmul.bf16.gmra.mxu0 %v1708
        %v2111 = vpop.f32.mrf.mxu0
        %v2112 = vadd.f32 %v2083, %v2111
        %v2113 = vpop.f32.mrf.mxu0
        %v2114 = vadd.f32 %v2085, %v2113
        %2115 = vmatmul.bf16.gmra.mxu0 %v1712
        %v2116 = vpop.f32.mrf.mxu0
        %v2117 = vadd.f32 %v2088, %v2116
        %v2118 = vpop.f32.mrf.mxu0
        %v2119 = vadd.f32 %v2090, %v2118
        %2120 = vdwg.mxu0
        %2121 = vmatpush.bf16.msra.mxu0 %v2001
        %2122 = vmatpush.bf16.msra.mxu0 %v2000
        %2123 = vmatpush.bf16.msra.mxu0 %v1999
        %2124 = vmatpush.bf16.msra.mxu0 %v1998
        %2125 = vmatpush.bf16.msra.mxu0 %v1997
        %2126 = vmatpush.bf16.msra.mxu0 %v1996
        %2127 = vmatpush.bf16.msra.mxu0 %v1995
        %2128 = vmatpush.bf16.msra.mxu0 %v1994
        %2129 = vmatmul.bf16.gmra.mxu0 %v1701
        %v2130 = vpop.f32.mrf.mxu0
        %v2131 = vadd.f32 %v2102, %v2130
        %v2132 = vpop.f32.mrf.mxu0
        %v2133 = vadd.f32 %v2104, %v2132
        %2134 = vmatmul.bf16.gmra.mxu0 %v1705
        %v2135 = vpop.f32.mrf.mxu0
        %v2136 = vadd.f32 %v2107, %v2135
        %v2137 = vpop.f32.mrf.mxu0
        %v2138 = vadd.f32 %v2109, %v2137
        %2139 = vmatmul.bf16.gmra.mxu0 %v1709
        %v2140 = vpop.f32.mrf.mxu0
        %v2141 = vadd.f32 %v2112, %v2140
        %v2142 = vpop.f32.mrf.mxu0
        %v2143 = vadd.f32 %v2114, %v2142
        %2144 = vmatmul.bf16.gmra.mxu0 %v1713
        %v2145 = vpop.f32.mrf.mxu0
        %v2146 = vadd.f32 %v2117, %v2145
        %v2147 = vpop.f32.mrf.mxu0
        %v2148 = vadd.f32 %v2119, %v2147
        %2149 = vdwg.mxu0
        %v2214 = vunpack.c.l.b16 %v1714
        %v2215 = vunpack.c.l.b16 %v1715
        %v2216 = vunpack.c.l.b16 %v1716
        %v2217 = vunpack.c.l.b16 %v1717
        %v2218 = vunpack.c.l.b16 %v1718
        %v2219 = vunpack.c.l.b16 %v1719
        %v2220 = vunpack.c.l.b16 %v1720
        %v2221 = vunpack.c.l.b16 %v1721
        %v2222 = vunpack.c.l.b16 %v1722
        %v2223 = vunpack.c.l.b16 %v1723
        %v2224 = vunpack.c.l.b16 %v1724
        %v2225 = vunpack.c.l.b16 %v1725
        %v2226 = vunpack.c.l.b16 %v1726
        %v2227 = vunpack.c.l.b16 %v1727
        %v2228 = vunpack.c.l.b16 %v1728
        %v2229 = vunpack.c.l.b16 %v1729
        %v2230 = vunpack.c.l.b16 %v1730
        %v2231 = vunpack.c.l.b16 %v1731
        %v2232 = vunpack.c.l.b16 %v1732
        %v2233 = vunpack.c.l.b16 %v1733
        %v2234 = vunpack.c.l.b16 %v1734
        %v2235 = vunpack.c.l.b16 %v1735
        %v2236 = vunpack.c.l.b16 %v1736
        %v2237 = vunpack.c.l.b16 %v1737
        %v2238 = vunpack.c.l.b16 %v1738
        %v2239 = vunpack.c.l.b16 %v1739
        %v2240 = vunpack.c.l.b16 %v1740
        %v2241 = vunpack.c.l.b16 %v1741
        %v2242 = vunpack.c.l.b16 %v1742
        %v2243 = vunpack.c.l.b16 %v1743
        %v2244 = vunpack.c.l.b16 %v1744
        %v2245 = vunpack.c.l.b16 %v1745
        %v2246 = vunpack.c.l.b16 %v1746
        %v2247 = vunpack.c.l.b16 %v1747
        %v2248 = vunpack.c.l.b16 %v1748
        %v2249 = vunpack.c.l.b16 %v1749
        %v2250 = vunpack.c.l.b16 %v1750
        %v2251 = vunpack.c.l.b16 %v1751
        %v2252 = vunpack.c.l.b16 %v1752
        %v2253 = vunpack.c.l.b16 %v1753
        %v2254 = vunpack.c.l.b16 %v1754
        %v2255 = vunpack.c.l.b16 %v1755
        %v2256 = vunpack.c.l.b16 %v1756
        %v2257 = vunpack.c.l.b16 %v1757
        %v2258 = vunpack.c.l.b16 %v1758
        %v2259 = vunpack.c.l.b16 %v1759
        %v2260 = vunpack.c.l.b16 %v1760
        %v2261 = vunpack.c.l.b16 %v1761
        %v2262 = vunpack.c.l.b16 %v1762
        %v2263 = vunpack.c.l.b16 %v1763
        %v2264 = vunpack.c.l.b16 %v1764
        %v2265 = vunpack.c.l.b16 %v1765
        %v2266 = vunpack.c.l.b16 %v1766
        %v2267 = vunpack.c.l.b16 %v1767
        %v2268 = vunpack.c.l.b16 %v1768
        %v2269 = vunpack.c.l.b16 %v1769
        %v2270 = vunpack.c.l.b16 %v1770
        %v2271 = vunpack.c.l.b16 %v1771
        %v2272 = vunpack.c.l.b16 %v1772
        %v2273 = vunpack.c.l.b16 %v1773
        %v2274 = vunpack.c.l.b16 %v1774
        %v2275 = vunpack.c.l.b16 %v1775
        %v2276 = vunpack.c.l.b16 %v1776
        %v2277 = vunpack.c.l.b16 %v1777
        %v2278 = vpack.c.b16 %v2215, %v2214
        %v2279 = vpack.c.b16 %v2217, %v2216
        %v2280 = vpack.c.b16 %v2219, %v2218
        %v2281 = vpack.c.b16 %v2221, %v2220
        %v2282 = vpack.c.b16 %v2223, %v2222
        %v2283 = vpack.c.b16 %v2225, %v2224
        %v2284 = vpack.c.b16 %v2227, %v2226
        %v2285 = vpack.c.b16 %v2229, %v2228
        %v2286 = vpack.c.b16 %v2231, %v2230
        %v2287 = vpack.c.b16 %v2233, %v2232
        %v2288 = vpack.c.b16 %v2235, %v2234
        %v2289 = vpack.c.b16 %v2237, %v2236
        %v2290 = vpack.c.b16 %v2239, %v2238
        %v2291 = vpack.c.b16 %v2241, %v2240
        %v2292 = vpack.c.b16 %v2243, %v2242
        %v2293 = vpack.c.b16 %v2245, %v2244
        %v2294 = vpack.c.b16 %v2247, %v2246
        %v2295 = vpack.c.b16 %v2249, %v2248
        %v2296 = vpack.c.b16 %v2251, %v2250
        %v2297 = vpack.c.b16 %v2253, %v2252
        %v2298 = vpack.c.b16 %v2255, %v2254
        %v2299 = vpack.c.b16 %v2257, %v2256
        %v2300 = vpack.c.b16 %v2259, %v2258
        %v2301 = vpack.c.b16 %v2261, %v2260
        %v2302 = vpack.c.b16 %v2263, %v2262
        %v2303 = vpack.c.b16 %v2265, %v2264
        %v2304 = vpack.c.b16 %v2267, %v2266
        %v2305 = vpack.c.b16 %v2269, %v2268
        %v2306 = vpack.c.b16 %v2271, %v2270
        %v2307 = vpack.c.b16 %v2273, %v2272
        %v2308 = vpack.c.b16 %v2275, %v2274
        %v2309 = vpack.c.b16 %v2277, %v2276
        %2342 = vmatpush.bf16.msra.mxu0 %v2285
        %2343 = vmatpush.bf16.msra.mxu0 %v2284
        %2344 = vmatpush.bf16.msra.mxu0 %v2283
        %2345 = vmatpush.bf16.msra.mxu0 %v2282
        %2346 = vmatpush.bf16.msra.mxu0 %v2281
        %2347 = vmatpush.bf16.msra.mxu0 %v2280
        %2348 = vmatpush.bf16.msra.mxu0 %v2279
        %2349 = vmatpush.bf16.msra.mxu0 %v2278
        %2350 = vmatmul.bf16.gmra.mxu0 %v1698
        %v2351 = vpop.f32.mrf.mxu0
        %v2352 = vadd.f32 %v2131, %v2351
        %v2353 = vpop.f32.mrf.mxu0
        %v2354 = vadd.f32 %v2133, %v2353
        %2355 = vmatmul.bf16.gmra.mxu0 %v1702
        %v2356 = vpop.f32.mrf.mxu0
        %v2357 = vadd.f32 %v2136, %v2356
        %v2358 = vpop.f32.mrf.mxu0
        %v2359 = vadd.f32 %v2138, %v2358
        %2360 = vmatmul.bf16.gmra.mxu0 %v1706
        %v2361 = vpop.f32.mrf.mxu0
        %v2362 = vadd.f32 %v2141, %v2361
        %v2363 = vpop.f32.mrf.mxu0
        %v2364 = vadd.f32 %v2143, %v2363
        %2365 = vmatmul.bf16.gmra.mxu0 %v1710
        %v2366 = vpop.f32.mrf.mxu0
        %v2367 = vadd.f32 %v2146, %v2366
        %v2368 = vpop.f32.mrf.mxu0
        %v2369 = vadd.f32 %v2148, %v2368
        %2370 = vdwg.mxu0
        %2371 = vmatpush.bf16.msra.mxu0 %v2293
        %2372 = vmatpush.bf16.msra.mxu0 %v2292
        %2373 = vmatpush.bf16.msra.mxu0 %v2291
        %2374 = vmatpush.bf16.msra.mxu0 %v2290
        %2375 = vmatpush.bf16.msra.mxu0 %v2289
        %2376 = vmatpush.bf16.msra.mxu0 %v2288
        %2377 = vmatpush.bf16.msra.mxu0 %v2287
        %2378 = vmatpush.bf16.msra.mxu0 %v2286
        %2379 = vmatmul.bf16.gmra.mxu0 %v1699
        %v2380 = vpop.f32.mrf.mxu0
        %v2381 = vadd.f32 %v2352, %v2380
        %v2382 = vpop.f32.mrf.mxu0
        %v2383 = vadd.f32 %v2354, %v2382
        %2384 = vmatmul.bf16.gmra.mxu0 %v1703
        %v2385 = vpop.f32.mrf.mxu0
        %v2386 = vadd.f32 %v2357, %v2385
        %v2387 = vpop.f32.mrf.mxu0
        %v2388 = vadd.f32 %v2359, %v2387
        %2389 = vmatmul.bf16.gmra.mxu0 %v1707
        %v2390 = vpop.f32.mrf.mxu0
        %v2391 = vadd.f32 %v2362, %v2390
        %v2392 = vpop.f32.mrf.mxu0
        %v2393 = vadd.f32 %v2364, %v2392
        %2394 = vmatmul.bf16.gmra.mxu0 %v1711
        %v2395 = vpop.f32.mrf.mxu0
        %v2396 = vadd.f32 %v2367, %v2395
        %v2397 = vpop.f32.mrf.mxu0
        %v2398 = vadd.f32 %v2369, %v2397
        %2399 = vdwg.mxu0
        %2400 = vmatpush.bf16.msra.mxu0 %v2301
        %2401 = vmatpush.bf16.msra.mxu0 %v2300
        %2402 = vmatpush.bf16.msra.mxu0 %v2299
        %2403 = vmatpush.bf16.msra.mxu0 %v2298
        %2404 = vmatpush.bf16.msra.mxu0 %v2297
        %2405 = vmatpush.bf16.msra.mxu0 %v2296
        %2406 = vmatpush.bf16.msra.mxu0 %v2295
        %2407 = vmatpush.bf16.msra.mxu0 %v2294
        %2408 = vmatmul.bf16.gmra.mxu0 %v1700
        %v2409 = vpop.f32.mrf.mxu0
        %v2410 = vadd.f32 %v2381, %v2409
        %v2411 = vpop.f32.mrf.mxu0
        %v2412 = vadd.f32 %v2383, %v2411
        %2413 = vmatmul.bf16.gmra.mxu0 %v1704
        %v2414 = vpop.f32.mrf.mxu0
        %v2415 = vadd.f32 %v2386, %v2414
        %v2416 = vpop.f32.mrf.mxu0
        %v2417 = vadd.f32 %v2388, %v2416
        %2418 = vmatmul.bf16.gmra.mxu0 %v1708
        %v2419 = vpop.f32.mrf.mxu0
        %v2420 = vadd.f32 %v2391, %v2419
        %v2421 = vpop.f32.mrf.mxu0
        %v2422 = vadd.f32 %v2393, %v2421
        %2423 = vmatmul.bf16.gmra.mxu0 %v1712
        %v2424 = vpop.f32.mrf.mxu0
        %v2425 = vadd.f32 %v2396, %v2424
        %v2426 = vpop.f32.mrf.mxu0
        %v2427 = vadd.f32 %v2398, %v2426
        %2428 = vdwg.mxu0
        %2429 = vmatpush.bf16.msra.mxu0 %v2309
        %2430 = vmatpush.bf16.msra.mxu0 %v2308
        %2431 = vmatpush.bf16.msra.mxu0 %v2307
        %2432 = vmatpush.bf16.msra.mxu0 %v2306
        %2433 = vmatpush.bf16.msra.mxu0 %v2305
        %2434 = vmatpush.bf16.msra.mxu0 %v2304
        %2435 = vmatpush.bf16.msra.mxu0 %v2303
        %2436 = vmatpush.bf16.msra.mxu0 %v2302
        %2437 = vmatmul.bf16.gmra.mxu0 %v1701
        %v2438 = vpop.f32.mrf.mxu0
        %v2439 = vadd.f32 %v2410, %v2438
        %v2440 = vpop.f32.mrf.mxu0
        %v2441 = vadd.f32 %v2412, %v2440
        %2442 = vmatmul.bf16.gmra.mxu0 %v1705
        %v2443 = vpop.f32.mrf.mxu0
        %v2444 = vadd.f32 %v2415, %v2443
        %v2445 = vpop.f32.mrf.mxu0
        %v2446 = vadd.f32 %v2417, %v2445
        %2447 = vmatmul.bf16.gmra.mxu0 %v1709
        %v2448 = vpop.f32.mrf.mxu0
        %v2449 = vadd.f32 %v2420, %v2448
        %v2450 = vpop.f32.mrf.mxu0
        %v2451 = vadd.f32 %v2422, %v2450
        %2452 = vmatmul.bf16.gmra.mxu0 %v1713
        %v2453 = vpop.f32.mrf.mxu0
        %v2454 = vadd.f32 %v2425, %v2453
        %v2455 = vpop.f32.mrf.mxu0
        %v2456 = vadd.f32 %v2427, %v2455
        %2457 = vdwg.mxu0
        %2458 = vst [vmem:[%s393] sm:$0xff] %v2439
        %2459 = vst [vmem:[%s393 + $0x8] sm:$0xff] %v2441
        %2460 = vst [vmem:[%s393 + $0x10] sm:$0xff] %v2444
        %2461 = vst [vmem:[%s393 + $0x18] sm:$0xff] %v2446
        %2462 = vst [vmem:[%s393 + $0x20] sm:$0xff] %v2449
        %2463 = vst [vmem:[%s393 + $0x28] sm:$0xff] %v2451
        %2464 = vst [vmem:[%s393 + $0x30] sm:$0xff] %v2454
        %2465 = vst [vmem:[%s393 + $0x38] sm:$0xff] %v2456
        %vm2466 = vcmask 31744
        %2467 = vst.msk [vmem:[%s421] sm:$0xff] %vm2466, %v1542
        %2468 = vst.msk [vmem:[%s421 + $0x8] sm:$0xff] %vm2466, %v1543
        %2469 = vst.msk [vmem:[%s421 + $0x10] sm:$0xff] %vm2466, %v1544
        %2470 = vst.msk [vmem:[%s421 + $0x18] sm:$0xff] %vm2466, %v1545
        %2471 = vst.msk [vmem:[%s421 + $0x20] sm:$0xff] %vm2466, %v1546
        %2472 = vst.msk [vmem:[%s421 + $0x28] sm:$0xff] %vm2466, %v1547
        %2473 = vst.msk [vmem:[%s421 + $0x30] sm:$0xff] %vm2466, %v1548
        %2474 = vst.msk [vmem:[%s421 + $0x38] sm:$0xff] %vm2466, %v1549
        %v2475 = vadd.f32 %v1666, %v1670
        %v2476 = vadd.f32 %v2475, %v1674
        %v2477 = vadd.f32 %v2476, %v1678
        %v2478 = vadd.f32 %v2477, %v1682
        %v2479 = vadd.f32 %v2478, %v1686
        %v2480 = vadd.f32 %v2479, %v1690
        %v2481 = vadd.f32 %v2480, %v1694
        %v2482 = vrot.slane %v2481, 4
        %v2483 = vadd.f32 %v2481, %v2482
        %v2484 = vrot.slane %v2483, 2
        %v2485 = vadd.f32 %v2483, %v2484
        %v2486 = vrot.slane %v2485, 1
        %v2487 = vadd.f32 %v2485, %v2486
        %v2488 = vadd.f32 %v1667, %v1671
        %v2489 = vadd.f32 %v2488, %v1675
        %v2490 = vadd.f32 %v2489, %v1679
        %v2491 = vadd.f32 %v2490, %v1683
        %v2492 = vadd.f32 %v2491, %v1687
        %v2493 = vadd.f32 %v2492, %v1691
        %v2494 = vadd.f32 %v2493, %v1695
        %v2495 = vrot.slane %v2494, 4
        %v2496 = vadd.f32 %v2494, %v2495
        %v2497 = vrot.slane %v2496, 2
        %v2498 = vadd.f32 %v2496, %v2497
        %v2499 = vrot.slane %v2498, 1
        %v2500 = vadd.f32 %v2498, %v2499
        %v2501 = vadd.f32 %v1668, %v1672
        %v2502 = vadd.f32 %v2501, %v1676
        %v2503 = vadd.f32 %v2502, %v1680
        %v2504 = vadd.f32 %v2503, %v1684
        %v2505 = vadd.f32 %v2504, %v1688
        %v2506 = vadd.f32 %v2505, %v1692
        %v2507 = vadd.f32 %v2506, %v1696
        %v2508 = vrot.slane %v2507, 4
        %v2509 = vadd.f32 %v2507, %v2508
        %v2510 = vrot.slane %v2509, 2
        %v2511 = vadd.f32 %v2509, %v2510
        %v2512 = vrot.slane %v2511, 1
        %v2513 = vadd.f32 %v2511, %v2512
        %v2514 = vadd.f32 %v1669, %v1673
        %v2515 = vadd.f32 %v2514, %v1677
        %v2516 = vadd.f32 %v2515, %v1681
        %v2517 = vadd.f32 %v2516, %v1685
        %v2518 = vadd.f32 %v2517, %v1689
        %v2519 = vadd.f32 %v2518, %v1693
        %v2520 = vadd.f32 %v2519, %v1697
        %v2521 = vrot.slane %v2520, 4
        %v2522 = vadd.f32 %v2520, %v2521
        %v2523 = vrot.slane %v2522, 2
        %v2524 = vadd.f32 %v2522, %v2523
        %v2525 = vrot.slane %v2524, 1
        %v2526 = vadd.f32 %v2524, %v2525
        %v2527 = vlaneseq
        %v2528 = vshrl.u32 %v2527, 7
        %vm2529 = vcmp.eq.s32.totalorder %v2528, 0
        %v2530 = vsel %vm2529, %v2487, 0.0
        %v2531 = vsel %vm2529, %v2500, 0.0
        %v2532 = vsel %vm2529, %v2513, 0.0
        %v2533 = vsel %vm2529, %v2526, 0.0
        %2534 = vst [vmem:[%s407] sm:$0xff] %v2530
        %2535 = vst [vmem:[%s407 + $0x8] sm:$0xff] %v2531
        %2536 = vst [vmem:[%s407 + $0x10] sm:$0xff] %v2532
        %2537 = vst [vmem:[%s407 + $0x18] sm:$0xff] %v2533
        %v2538 = vsub.f32 %v2439, %v423
        %v2539 = vsub.f32 %v2441, %v424
        %v2540 = vsub.f32 %v2444, %v425
        %v2541 = vsub.f32 %v2446, %v426
        %v2542 = vsub.f32 %v2449, %v427
        %v2543 = vsub.f32 %v2451, %v428
        %v2544 = vsub.f32 %v2454, %v429
        %v2545 = vsub.f32 %v2456, %v430
        %v2546 = vmul.f32 %v2538, %v2538
        %v2547 = vmul.f32 %v2539, %v2539
        %v2548 = vmul.f32 %v2540, %v2540
        %v2549 = vmul.f32 %v2541, %v2541
        %v2550 = vmul.f32 %v2542, %v2542
        %v2551 = vmul.f32 %v2543, %v2543
        %v2552 = vmul.f32 %v2544, %v2544
        %v2553 = vmul.f32 %v2545, %v2545
        %v2554 = vadd.f32 %v2546, %v2547
        %v2555 = vadd.f32 %v2554, %v2548
        %v2556 = vadd.f32 %v2555, %v2549
        %v2557 = vadd.f32 %v2556, %v2550
        %v2558 = vadd.f32 %v2557, %v2551
        %v2559 = vadd.f32 %v2558, %v2552
        %v2560 = vadd.f32 %v2559, %v2553
        %2561 = vadd.xlane.f32.xlu0 %v2560
        %v2562 = vpop.xlane.xlu0 %2561
        %v2563 = vrot.slane %v2562, 4
        %v2564 = vadd.f32 %v2562, %v2563
        %v2565 = vrot.slane %v2564, 2
        %v2566 = vadd.f32 %v2564, %v2565
        %v2567 = vrot.slane %v2566, 1
        %v2568 = vadd.f32 %v2566, %v2567
        %s2569 = vtos %v2568
        %vm2570 = vmand %vm2529, %vm934
        %v2571 = vstv %s2569
        %v2572 = vsel %vm2570, %v2571, 0.0
        %2573 = vst [vmem:[%s414] sm:$0xff] %v2572
        %s2574 = sand.u32 %s149, 1
        %s2575 = scalar_lea.sflag [#allocation4], %s2574
        %s2576 = sand.u32 %s149, 1
        %s2577 = smul.addr %s2576, 64
        %s2578 = scalar_lea.vmem [#allocation11], %s2577
        %s2579 = smul.u32 8, %s31
        %p2580 = scmp.lt.s32.totalorder %s2579, 15
        %s2581 = scalar_select %p2580, %s2579, 15
        %s2582 = smul.addr %s2581, 8
        %s2583 = scalar_lea.vmem %s6, %s2582
        %s2584 = sand.u32 %s31, 1
        %s2585 = scalar_lea.sflag [#allocation13], %s2584
        %s2586 = sand.u32 %s201, 1
        %s2587 = smul.addr %s2586, 32
        %s2588 = scalar_lea.vmem [#allocation12], %s2587
        %s2589 = sand.u32 %s31, 1
        %s2590 = scalar_lea.sflag [#allocation13], %s2589
        %s2591 = sand.u32 %s227, 1
        %s2592 = smul.addr %s2591, 8
        %s2593 = scalar_lea.vmem [#allocation14], %s2592
        // Predicated region
        $region61: #{tpu_custom_call.1} parent=39 // pred_check
          %p2594 = pneg %p159
        $region62: #{tpu_custom_call.1} parent=39 // pred_check_branch
          %2596 = sbr.rel (%p2594) target = $region64
        $region63: #{tpu_custom_call.1} parent=39 // pred_region
          %s2597 = smul.u32 8, %s31
          %2599 = vsyncadd %s2575, 0
          %s2600 = smul.addr %s2597, 8
          %s2601 = scalar_lea.hbm %s5, %s2600
          %s2602 = sshll.u32 %s2578, 4
          %s2603 = int_to_ptr.vmem [resolvable:$true] %s2602
          %s2604 = sshll.u32 %s2601, 4
          %s2605 = int_to_ptr.hbm [resolvable:$true] %s2604
          %2610 = dma.vmem_to_hbm [thread:$0]  %s2603, 1024, %s2605, %s2575, 128, 128, 8
        $region64: #{tpu_custom_call.1} parent=39 // pred_fallthru
          _
        // Predicated region
        $region65: #{tpu_custom_call.1} parent=39 // pred_check
          %p2611 = pneg %p185
        $region66: #{tpu_custom_call.1} parent=39 // pred_check_branch
          %2613 = sbr.rel (%p2611) target = $region68
        $region67: #{tpu_custom_call.1} parent=39 // pred_region
          %s2614 = smul.u32 8, %s31
        $region68: #{tpu_custom_call.1} parent=39 // pred_fallthru
          _
        // Predicated region
        $region69: #{tpu_custom_call.1} parent=39 // pred_check
          %p2615 = pneg %p211
        $region70: #{tpu_custom_call.1} parent=39 // pred_check_branch
          %2617 = sbr.rel (%p2615) target = $region72
        $region71: #{tpu_custom_call.1} parent=39 // pred_region
          %2619 = vsyncadd %s2585, 0
          %s2620 = smul.addr %s31, 4
          %s2621 = smul.addr %s2620, 8
          %s2622 = scalar_lea.hbm %s7, %s2621
          %s2624 = sshll.u32 %s2588, 4
          %s2625 = int_to_ptr.vmem [resolvable:$true] %s2624
          %s2626 = sshll.u32 %s2622, 4
          %s2627 = int_to_ptr.hbm [resolvable:$true] %s2626
          %2629 = dma.vmem_to_hbm [thread:$0]  %s2625, 512, %s2627, %s2585
        $region72: #{tpu_custom_call.1} parent=39 // pred_fallthru
          _
        // Predicated region
        $region73: #{tpu_custom_call.1} parent=39 // pred_check
          %p2630 = pneg %p237
        $region74: #{tpu_custom_call.1} parent=39 // pred_check_branch
          %2632 = sbr.rel (%p2630) target = $region76
        $region75: #{tpu_custom_call.1} parent=39 // pred_region
          %2634 = vsyncadd %s2590, 0
          %s2635 = smul.addr %s31, 8
          %s2636 = scalar_lea.hbm %s8, %s2635
          %s2638 = sshll.u32 %s2593, 4
          %s2639 = int_to_ptr.vmem [resolvable:$true] %s2638
          %s2640 = sshll.u32 %s2636, 4
          %s2641 = int_to_ptr.hbm [resolvable:$true] %s2640
          %2643 = dma.vmem_to_hbm [thread:$0]  %s2639, 128, %s2641, %s2590
        $region76: #{tpu_custom_call.1} parent=39 // pred_fallthru
          _
      $region40: #{tpu_custom_call.1} parent=5 // pred_fallthru
        _
      %p2644 = scmp.le.s32.totalorder 2, %s26
      // Predicated region
      $region77: #{tpu_custom_call.1} parent=5 // pred_check
        %p2645 = pneg %p2644
      $region78: #{tpu_custom_call.1} parent=5 // pred_check_branch
        %2647 = sbr.rel (%p2645) target = $region80
      $region79: #{tpu_custom_call.1} parent=5 // pred_region
        %s2648 = ssub.s32 %s26, 2
        // Predicated region
        $region81: #{tpu_custom_call.1} parent=79 // pred_check
          %p2649 = pneg %p165
        $region82: #{tpu_custom_call.1} parent=79 // pred_check_branch
          %2651 = sbr.rel (%p2649) target = $region84
        $region83: #{tpu_custom_call.1} parent=79 // pred_region
          %s2652 = sand.u32 %s150, 1
          %s2653 = scalar_lea.sflag [#allocation4], %s2652
          %s2654 = sand.u32 %s150, 1
          %s2655 = smul.addr %s2654, 64
          %s2656 = scalar_lea.vmem [#allocation11], %s2655
          %2658 = dma.done %s2653, 1024
        $region84: #{tpu_custom_call.1} parent=79 // pred_fallthru
          _
        // Predicated region
        $region85: #{tpu_custom_call.1} parent=79 // pred_check
          %p2659 = pneg %p191
        $region86: #{tpu_custom_call.1} parent=79 // pred_check_branch
          %2661 = sbr.rel (%p2659) target = $region88
        $region87: #{tpu_custom_call.1} parent=79 // pred_region
          %s2662 = smul.u32 8, %s32
          %p2663 = scmp.lt.s32.totalorder %s2662, 15
          %s2664 = scalar_select %p2663, %s2662, 15
          %s2665 = smul.addr %s2664, 8
          %s2666 = scalar_lea.vmem %s6, %s2665
        $region88: #{tpu_custom_call.1} parent=79 // pred_fallthru
          _
        // Predicated region
        $region89: #{tpu_custom_call.1} parent=79 // pred_check
          %p2667 = pneg %p217
        $region90: #{tpu_custom_call.1} parent=79 // pred_check_branch
          %2669 = sbr.rel (%p2667) target = $region92
        $region91: #{tpu_custom_call.1} parent=79 // pred_region
          %s2670 = sand.u32 %s32, 1
          %s2671 = scalar_lea.sflag [#allocation13], %s2670
          %s2672 = sand.u32 %s202, 1
          %s2673 = smul.addr %s2672, 32
          %s2674 = scalar_lea.vmem [#allocation12], %s2673
          %2676 = dma.done %s2671, 512
        $region92: #{tpu_custom_call.1} parent=79 // pred_fallthru
          _
        // Predicated region
        $region93: #{tpu_custom_call.1} parent=79 // pred_check
          %p2677 = pneg %p243
        $region94: #{tpu_custom_call.1} parent=79 // pred_check_branch
          %2679 = sbr.rel (%p2677) target = $region96
        $region95: #{tpu_custom_call.1} parent=79 // pred_region
          %s2680 = sand.u32 %s32, 1
          %s2681 = scalar_lea.sflag [#allocation13], %s2680
          %s2682 = sand.u32 %s228, 1
          %s2683 = smul.addr %s2682, 8
          %s2684 = scalar_lea.vmem [#allocation14], %s2683
          %2686 = dma.done %s2681, 128
        $region96: #{tpu_custom_call.1} parent=79 // pred_fallthru
          _
      $region80: #{tpu_custom_call.1} parent=5 // pred_fallthru
        _
    $region6: #{tpu_custom_call.1} parent=1 // loop_footer
      %s30 = sadd.s32 1, %s26
    $region7: #{tpu_custom_call.1} parent=1 // loop_footer_branch
      %25 = sbr.rel target = $region3
    $region8: #{tpu_custom_call.1} parent=1 // loop_exit
      _
    %2687 = vsyncpa [#allocation3], 1
    %s2688 = scalar_lea.sflag [#allocation3], 1
    %2689 = vsyncpa %s2688, 1
    %2690 = vsyncpa [#allocation6], 1
    %2691 = vsyncpa [#allocation9], 1
    %2692 = vsyncpa [#allocation4], 1
    %s2693 = scalar_lea.sflag [#allocation4], 1
    %2694 = vsyncpa %s2693, 1
    %2695 = vsyncpa [#allocation13], 1
    %s2696 = scalar_lea.sflag [#allocation13], 1
    %2697 = vsyncpa %s2696, 1

</llo_original>
